<compile_context>
chip_gen: v6e
topology: v6e:2x2x1
jax: 0.10.0
libtpu: 0.0.40
codegen_flags: <defaults>
</compile_context>

<pallas_src>
import functools

import jax
import jax.numpy as jnp
from jax import lax
from jax.experimental import pallas as pl
from jax.experimental.pallas import tpu as pltpu

EMB_DIM = 32
EMB_PAD = 128          # lane-dense embedding output width
FEAT_DIM = 1024
KSIZE = 3


def _image_model_kernel(patches_ref, wconv_ref, bconv_ref, wemb_ref, bemb_ref,
                        feat_ref, emb_ref, acc_ref, *, hw_total, chunk):
    # patches: (bt, hw_tile, CKK_PAD) bf16   wconv: (CKK_PAD, 1024) bf16
    # bconv:   (1, 1024) f32                 wemb:  (1024, EMB_PAD) bf16
    # bemb:    (1, EMB_PAD) f32
    # feat:    (bt, 1, 1024) f32 out         emb:   (bt, 1, EMB_PAD) f32 out
    # acc:     (bt, 1024) f32 scratch (pooled running sum for this batch block)
    h = pl.program_id(1)

    @pl.when(h == 0)
    def _init():
        acc_ref[...] = jnp.zeros_like(acc_ref)

    bt, hw_tile, ckk = patches_ref.shape
    n_chunks = hw_tile // chunk

    def body(ci, acc):
        start = pl.multiple_of(ci * chunk, chunk)
        p = patches_ref[:, pl.ds(start, chunk), :]            # (bt, chunk, ckk) bf16
        p2d = p.reshape(bt * chunk, ckk)
        # conv-as-matmul: one K=32 bf16 MXU matmul, f32 accumulation.
        conv = jnp.dot(p2d, wconv_ref[...], preferred_element_type=jnp.float32)
        conv = jnp.maximum(conv + bconv_ref[...], 0.0)        # bias + ReLU (f32)
        # pooled partial sum per batch row: plain sublane reduce (VPU/XLU are
        # idle while MXU/DMA work) -- no per-step selector matmul.
        return acc + jnp.sum(conv.reshape(bt, chunk, FEAT_DIM), axis=1)

    acc_tile = lax.fori_loop(0, n_chunks, body,
                             jnp.zeros((bt, FEAT_DIM), jnp.float32),
                             unroll=True)
    acc_ref[...] += acc_tile

    @pl.when(h == pl.num_programs(1) - 1)
    def _finalize():
        feat = acc_ref[...] * (1.0 / hw_total)                # global average pool
        feat_ref[:, 0, :] = feat.astype(feat_ref.dtype)

        # embedding = Linear(1024, emb_dim): bf16 operands, f32 accumulation.
        emb = jnp.dot(feat.astype(jnp.bfloat16), wemb_ref[...],
                      preferred_element_type=jnp.float32)
        emb = emb + bemb_ref[...]
        sq = jnp.sum(emb * emb, axis=1, keepdims=True)        # padded lanes are 0
        inv = lax.rsqrt(jnp.maximum(sq, 1e-24))               # EUP rsqrt, no divide
        emb_ref[:, 0, :] = (emb * inv).astype(emb_ref.dtype)


def _im2col_bf16(x, ckk_pad):
    """x: (B, C, H, W) -> (B, H*W, ckk_pad) bf16 patches, 'same' pad, stride 1.

    Built entirely in bf16 with the K pad fused, so no f32 (B, HW, C*K*K)
    intermediate is ever written to HBM."""
    x = x.astype(jnp.bfloat16)
    B, C, H, W = x.shape
    xp = jnp.pad(x, ((0, 0), (0, 0), (1, 1), (1, 1)))
    cols = [xp[:, :, kh:kh + H, kw:kw + W]
            for kh in range(KSIZE) for kw in range(KSIZE)]    # 9 x (B, C, H, W)
    p = jnp.stack(cols, axis=2)                               # (B, C, 9, H, W)
    p = jnp.transpose(p, (0, 3, 4, 1, 2))                     # (B, H, W, C, 9)
    p = p.reshape(B, H * W, C * KSIZE * KSIZE)
    ckk = C * KSIZE * KSIZE
    if ckk_pad > ckk:
        p = jnp.pad(p, ((0, 0), (0, 0), (0, ckk_pad - ckk)))
    return p


@functools.partial(jax.jit, static_argnames=("hw_tile", "chunk", "batch_tile"))
def image_model_forward(x, wconv, bconv, wemb, bemb, *, hw_tile=1024, chunk=128,
                        batch_tile=None):
    """Returns (feat, emb) exactly like ImageModel.forward."""
    B, C, H, W = x.shape
    HW = H * W
    ckk = C * KSIZE * KSIZE
    ckk_pad = ((ckk + 31) // 32) * 32          # keep K pad at 32 (not 128)

    patches = _im2col_bf16(x, ckk_pad)         # (B, HW, ckk_pad) bf16, pad fused

    wconv_p = jnp.pad(wconv.astype(jnp.float32),
                      ((0, ckk_pad - ckk), (0, 0))).astype(jnp.bfloat16)
    wemb_p = jnp.pad(wemb.astype(jnp.float32),
                     ((0, 0), (0, EMB_PAD - EMB_DIM))).astype(jnp.bfloat16)
    bemb_p = jnp.pad(bemb.astype(jnp.float32), ((0, 0), (0, EMB_PAD - EMB_DIM)))
    bconv_f = bconv.astype(jnp.float32)

    hw_tile = min(hw_tile, HW)
    chunk = min(chunk, hw_tile)
    # bf16 sublane packing is 16: spatial tile / chunk must be 16-aligned.
    assert HW % hw_tile == 0 and hw_tile % 16 == 0
    assert hw_tile % chunk == 0 and chunk % 16 == 0
    n_hw = HW // hw_tile

    if batch_tile is None:
        # Give the v7x megacore a real parallel axis when the batch allows it.
        batch_tile = B // 2 if (B >= 2 and B % 2 == 0) else B
    bt = batch_tile
    assert B % bt == 0

    kernel = functools.partial(_image_model_kernel, hw_total=HW, chunk=chunk)

    grid_spec = pltpu.PrefetchScalarGridSpec(
        num_scalar_prefetch=0,
        grid=(B // bt, n_hw),                  # (batch blocks, spatial tiles)
        in_specs=[
            # per-step varying patch slab (pipelined / double-buffered);
            # bump to pipeline_mode=pl.Buffered(3) only if its DMA stays exposed.
            pl.BlockSpec((bt, hw_tile, ckk_pad), lambda b, h: (b, h, 0)),
            # resident weights / biases (constant index_map -> DMA'd once)
            pl.BlockSpec((ckk_pad, FEAT_DIM), lambda b, h: (0, 0)),
            pl.BlockSpec((1, FEAT_DIM), lambda b, h: (0, 0)),
            pl.BlockSpec((FEAT_DIM, EMB_PAD), lambda b, h: (0, 0)),
            pl.BlockSpec((1, EMB_PAD), lambda b, h: (0, 0)),
        ],
        out_specs=(
            pl.BlockSpec((bt, 1, FEAT_DIM), lambda b, h: (b, 0, 0)),
            pl.BlockSpec((bt, 1, EMB_PAD), lambda b, h: (b, 0, 0)),
        ),
        scratch_shapes=[pltpu.VMEM((bt, FEAT_DIM), jnp.float32)],
    )

    feat3, emb3 = pl.pallas_call(
        kernel,
        out_shape=(jax.ShapeDtypeStruct((B, 1, FEAT_DIM), jnp.float32),
                   jax.ShapeDtypeStruct((B, 1, EMB_PAD), jnp.float32)),
        grid_spec=grid_spec,
        compiler_params=pltpu.CompilerParams(
            dimension_semantics=("parallel", "arbitrary"),
            # explicit ceiling: safe on v7x's 64 MiB physical VMEM, above the
            # 32 MiB scoped default; raise towards ~96 MiB on v5e/v6e when
            # sweeping larger hw_tile.
            vmem_limit_bytes=48 * 1024 * 1024),
    )(patches, wconv_p, bconv_f, wemb_p, bemb_p)

    return feat3[:, 0, :], emb3[:, 0, :EMB_DIM]


def _reference(x, wconv, bconv, wemb, bemb):
    # Mirrors the kernel's numerics: bf16 conv/emb operands, f32 accumulation.
    C = x.shape[1]
    patches = _im2col_bf16(x, C * KSIZE * KSIZE)
    conv = jnp.einsum("bpc,cf->bpf", patches, wconv.astype(jnp.bfloat16),
                      preferred_element_type=jnp.float32)
    conv = jnp.maximum(conv + bconv, 0.0)
    feat = jnp.mean(conv, axis=1)
    emb = jnp.dot(feat.astype(jnp.bfloat16), wemb.astype(jnp.bfloat16),
                  preferred_element_type=jnp.float32) + bemb
    norm = jnp.sqrt(jnp.sum(emb * emb, axis=1, keepdims=True))
    return feat, emb / jnp.maximum(norm, 1e-12)


if __name__ == "__main__":
    key = jax.random.PRNGKey(0)
    k_x, k_wc, k_bc, k_we, k_be = jax.random.split(key, 5)

    B, C, H, W = 2, 3, 16, 16
    x = jax.random.normal(k_x, (B, C, H, W), dtype=jnp.float32)

    # deterministic parameter init (synthetic, no checkpoint load)
    ckk = C * KSIZE * KSIZE
    wconv = 0.05 * jax.random.normal(k_wc, (ckk, FEAT_DIM), dtype=jnp.float32)
    bconv = 0.01 * jax.random.normal(k_bc, (1, FEAT_DIM), dtype=jnp.float32)
    wemb = 0.03 * jax.random.normal(k_we, (FEAT_DIM, EMB_DIM), dtype=jnp.float32)
    bemb = 0.01 * jax.random.normal(k_be, (1, EMB_DIM), dtype=jnp.float32)

    feat, emb = image_model_forward(x, wconv, bconv, wemb, bemb)
    jax.block_until_ready((feat, emb))

    feat_ref, emb_ref = _reference(x, wconv, bconv, wemb, bemb)
    assert feat.shape == (B, FEAT_DIM) and emb.shape == (B, EMB_DIM)
    assert jnp.allclose(feat, feat_ref, atol=2e-3, rtol=2e-3), \
        float(jnp.max(jnp.abs(feat - feat_ref)))
    assert jnp.allclose(emb, emb_ref, atol=2e-3, rtol=2e-3), \
        float(jnp.max(jnp.abs(emb - emb_ref)))
    # emb rows are unit-norm
    assert jnp.allclose(jnp.linalg.norm(emb, axis=1), 1.0, atol=1e-3)

    print("KERNEL_OK")
</pallas_src>

<mosaic_0001>
module attributes {stable_mosaic.version = 11 : i64} {
  func.func @_image_model_kernel(%arg0: i32, %arg1: i32, %arg2: memref<1x256x32xbf16, #tpu.memory_space<vmem>>, %arg3: memref<32x1024xbf16, #tpu.memory_space<vmem>>, %arg4: memref<1x1024xf32, #tpu.memory_space<vmem>>, %arg5: memref<1024x128xbf16, #tpu.memory_space<vmem>>, %arg6: memref<1x128xf32, #tpu.memory_space<vmem>>, %arg7: memref<1x1x1024xf32, #tpu.memory_space<vmem>>, %arg8: memref<1x1x128xf32, #tpu.memory_space<vmem>>, %arg9: memref<1x1024xf32, #tpu.memory_space<vmem>>) attributes {dimension_semantics = [#tpu.dimension_semantics<parallel>, #tpu.dimension_semantics<arbitrary>], iteration_bounds = array<i64: 2, 1>, scalar_prefetch = 0 : i64, scratch_operands = 1 : i64, tpu.core_type = #tpu.core_type<tc>, window_params = [{transform_indices = @transform_0, window_bounds = array<i64: 1, 256, 32>}, {pipeline_mode = #tpu.pipeline_mode<synchronous>, transform_indices = @transform_1, window_bounds = array<i64: 32, 1024>}, {pipeline_mode = #tpu.pipeline_mode<synchronous>, transform_indices = @transform_2, window_bounds = array<i64: 1, 1024>}, {pipeline_mode = #tpu.pipeline_mode<synchronous>, transform_indices = @transform_3, window_bounds = array<i64: 1024, 128>}, {pipeline_mode = #tpu.pipeline_mode<synchronous>, transform_indices = @transform_4, window_bounds = array<i64: 1, 128>}, {transform_indices = @transform_5, window_bounds = array<i64: 1, 1, 1024>}, {transform_indices = @transform_6, window_bounds = array<i64: 1, 1, 128>}]} {
    %c0_i32 = arith.constant 0 : i32
    %0 = arith.cmpi eq, %arg1, %c0_i32 : i32
    %1 = arith.extui %0 : i1 to i32
    %c0_i32_0 = arith.constant 0 : i32
    %2 = arith.cmpi ne, %1, %c0_i32_0 : i32
    scf.if %2 {
      %cst_26 = arith.constant 0.000000e+00 : f32
      %40 = vector.broadcast %cst_26 : f32 to vector<1x1024xf32>
      %c0_27 = arith.constant 0 : index
      %c0_28 = arith.constant 0 : index
      %41 = vector.load %arg9[%c0_27, %c0_28] : memref<1x1024xf32, #tpu.memory_space<vmem>>, vector<1x1024xf32>
      tpu.vector_store %arg9[%c0_27, %c0_28], %40 {strides = array<i32>} : memref<1x1024xf32, #tpu.memory_space<vmem>>, vector<1x1024xf32>,
    } else {
    }
    %cst = arith.constant 0.000000e+00 : f32
    %3 = vector.broadcast %cst : f32 to vector<1x1024xf32>
    %c0_i32_1 = arith.constant 0 : i32
    %c128_i32 = arith.constant 128 : i32
    %4 = arith.muli %c0_i32_1, %c128_i32 : i32
    %5 = tpu.assume_multiple %4, 128 : i32
    %c0 = arith.constant 0 : index
    %6 = arith.index_cast %5 : i32 to index
    %c0_2 = arith.constant 0 : index
    %7 = vector.load %arg2[%c0, %6, %c0_2] : memref<1x256x32xbf16, #tpu.memory_space<vmem>>, vector<1x128x32xbf16>
    %8 = vector.shape_cast %7 : vector<1x128x32xbf16> to vector<128x32xbf16>
    %c0_3 = arith.constant 0 : index
    %c0_4 = arith.constant 0 : index
    %9 = vector.load %arg3[%c0_3, %c0_4] : memref<32x1024xbf16, #tpu.memory_space<vmem>>, vector<32x1024xbf16>
    %cst_5 = arith.constant dense<0.000000e+00> : vector<128x1024xf32>
    %10 = tpu.matmul %8, %9, %cst_5 {dimension_numbers = #tpu.dot_dimension_numbers<[1], [0], [0], [1], [0, 0, 1, 1], [], []>} : vector<128x32xbf16>, vector<32x1024xbf16>, vector<128x1024xf32> -> vector<128x1024xf32>
    %c0_6 = arith.constant 0 : index
    %c0_7 = arith.constant 0 : index
    %11 = vector.load %arg4[%c0_6, %c0_7] : memref<1x1024xf32, #tpu.memory_space<vmem>>, vector<1x1024xf32>
    %12 = vector.broadcast %11 : vector<1x1024xf32> to vector<128x1024xf32>
    %13 = arith.addf %10, %12 : vector<128x1024xf32>
    %cst_8 = arith.constant 0.000000e+00 : f32
    %14 = vector.broadcast %cst_8 : f32 to vector<128x1024xf32>
    %15 = arith.maximumf %13, %14 : vector<128x1024xf32>
    %16 = vector.shape_cast %15 : vector<128x1024xf32> to vector<1x128x1024xf32>
    %cst_9 = arith.constant dense<0.000000e+00> : vector<1x1024xf32>
    %17 = vector.multi_reduction <add>, %16, %cst_9 [1] : vector<1x128x1024xf32> to vector<1x1024xf32>
    %18 = arith.addf %3, %17 : vector<1x1024xf32>
    %c1_i32 = arith.constant 1 : i32
    %c128_i32_10 = arith.constant 128 : i32
    %19 = arith.muli %c1_i32, %c128_i32_10 : i32
    %20 = tpu.assume_multiple %19, 128 : i32
    %c0_11 = arith.constant 0 : index
    %21 = arith.index_cast %20 : i32 to index
    %c0_12 = arith.constant 0 : index
    %22 = vector.load %arg2[%c0_11, %21, %c0_12] : memref<1x256x32xbf16, #tpu.memory_space<vmem>>, vector<1x128x32xbf16>
    %23 = vector.shape_cast %22 : vector<1x128x32xbf16> to vector<128x32xbf16>
    %c0_13 = arith.constant 0 : index
    %c0_14 = arith.constant 0 : index
    %24 = vector.load %arg3[%c0_13, %c0_14] : memref<32x1024xbf16, #tpu.memory_space<vmem>>, vector<32x1024xbf16>
    %cst_15 = arith.constant dense<0.000000e+00> : vector<128x1024xf32>
    %25 = tpu.matmul %23, %24, %cst_15 {dimension_numbers = #tpu.dot_dimension_numbers<[1], [0], [0], [1], [0, 0, 1, 1], [], []>} : vector<128x32xbf16>, vector<32x1024xbf16>, vector<128x1024xf32> -> vector<128x1024xf32>
    %c0_16 = arith.constant 0 : index
    %c0_17 = arith.constant 0 : index
    %26 = vector.load %arg4[%c0_16, %c0_17] : memref<1x1024xf32, #tpu.memory_space<vmem>>, vector<1x1024xf32>
    %27 = vector.broadcast %26 : vector<1x1024xf32> to vector<128x1024xf32>
    %28 = arith.addf %25, %27 : vector<128x1024xf32>
    %cst_18 = arith.constant 0.000000e+00 : f32
    %29 = vector.broadcast %cst_18 : f32 to vector<128x1024xf32>
    %30 = arith.maximumf %28, %29 : vector<128x1024xf32>
    %31 = vector.shape_cast %30 : vector<128x1024xf32> to vector<1x128x1024xf32>
    %cst_19 = arith.constant dense<0.000000e+00> : vector<1x1024xf32>
    %32 = vector.multi_reduction <add>, %31, %cst_19 [1] : vector<1x128x1024xf32> to vector<1x1024xf32>
    %33 = arith.addf %18, %32 : vector<1x1024xf32>
    %c2_i32 = arith.constant 2 : i32
    %c0_20 = arith.constant 0 : index
    %c0_21 = arith.constant 0 : index
    %34 = vector.load %arg9[%c0_20, %c0_21] : memref<1x1024xf32, #tpu.memory_space<vmem>>, vector<1x1024xf32>
    %35 = arith.addf %34, %33 : vector<1x1024xf32>
    %c0_22 = arith.constant 0 : index
    %c0_23 = arith.constant 0 : index
    %36 = vector.load %arg9[%c0_22, %c0_23] : memref<1x1024xf32, #tpu.memory_space<vmem>>, vector<1x1024xf32>
    tpu.vector_store %arg9[%c0_22, %c0_23], %35 {strides = array<i32>} : memref<1x1024xf32, #tpu.memory_space<vmem>>, vector<1x1024xf32>,
    %c0_i32_24 = arith.constant 0 : i32
    %37 = arith.cmpi eq, %arg1, %c0_i32_24 : i32
    %38 = arith.extui %37 : i1 to i32
    %c0_i32_25 = arith.constant 0 : i32
    %39 = arith.cmpi ne, %38, %c0_i32_25 : i32
    scf.if %39 {
      %c0_26 = arith.constant 0 : index
      %c0_27 = arith.constant 0 : index
      %40 = vector.load %arg9[%c0_26, %c0_27] : memref<1x1024xf32, #tpu.memory_space<vmem>>, vector<1x1024xf32>
      %cst_28 = arith.constant 3.906250e-03 : f32
      %41 = vector.broadcast %cst_28 : f32 to vector<1x1024xf32>
      %42 = arith.mulf %40, %41 : vector<1x1024xf32>
      %c0_29 = arith.constant 0 : index
      %c0_30 = arith.constant 0 : index
      %c0_31 = arith.constant 0 : index
      %43 = vector.load %arg7[%c0_29, %c0_30, %c0_31] : memref<1x1x1024xf32, #tpu.memory_space<vmem>>, vector<1x1x1024xf32>
      %44 = vector.shape_cast %43 : vector<1x1x1024xf32> to vector<1x1024xf32>
      %45 = vector.shape_cast %42 : vector<1x1024xf32> to vector<1x1x1024xf32>
      tpu.vector_store %arg7[%c0_29, %c0_30, %c0_31], %45 {strides = array<i32>} : memref<1x1x1024xf32, #tpu.memory_space<vmem>>, vector<1x1x1024xf32>,
      %46 = arith.truncf %42 : vector<1x1024xf32> to vector<1x1024xbf16>
      %c0_32 = arith.constant 0 : index
      %c0_33 = arith.constant 0 : index
      %47 = vector.load %arg5[%c0_32, %c0_33] : memref<1024x128xbf16, #tpu.memory_space<vmem>>, vector<1024x128xbf16>
      %cst_34 = arith.constant dense<0.000000e+00> : vector<1x128xf32>
      %48 = tpu.matmul %46, %47, %cst_34 {dimension_numbers = #tpu.dot_dimension_numbers<[1], [0], [0], [1], [0, 0, 1, 1], [], []>} : vector<1x1024xbf16>, vector<1024x128xbf16>, vector<1x128xf32> -> vector<1x128xf32>
      %c0_35 = arith.constant 0 : index
      %c0_36 = arith.constant 0 : index
      %49 = vector.load %arg6[%c0_35, %c0_36] : memref<1x128xf32, #tpu.memory_space<vmem>>, vector<1x128xf32>
      %50 = arith.addf %48, %49 : vector<1x128xf32>
      %51 = arith.mulf %50, %50 : vector<1x128xf32>
      %cst_37 = arith.constant dense<0.000000e+00> : vector<1xf32>
      %52 = vector.multi_reduction <add>, %51, %cst_37 [1] : vector<1x128xf32> to vector<1xf32>
      %53 = vector.shape_cast %52 : vector<1xf32> to vector<1x1xf32>
      %cst_38 = arith.constant 1.000000e-24 : f32
      %54 = vector.broadcast %cst_38 : f32 to vector<1x1xf32>
      %55 = arith.maximumf %53, %54 : vector<1x1xf32>
      %56 = math.rsqrt %55 : vector<1x1xf32>
      %57 = vector.broadcast %56 : vector<1x1xf32> to vector<1x128xf32>
      %58 = arith.mulf %50, %57 : vector<1x128xf32>
      %c0_39 = arith.constant 0 : index
      %c0_40 = arith.constant 0 : index
      %c0_41 = arith.constant 0 : index
      %59 = vector.load %arg8[%c0_39, %c0_40, %c0_41] : memref<1x1x128xf32, #tpu.memory_space<vmem>>, vector<1x1x128xf32>
      %60 = vector.shape_cast %59 : vector<1x1x128xf32> to vector<1x128xf32>
      %61 = vector.shape_cast %58 : vector<1x128xf32> to vector<1x1x128xf32>
      tpu.vector_store %arg8[%c0_39, %c0_40, %c0_41], %61 {strides = array<i32>} : memref<1x1x128xf32, #tpu.memory_space<vmem>>, vector<1x1x128xf32>,
    } else {
    }
    return
  }
  func.func @transform_0(%arg0: i32, %arg1: i32) -> (i32, i32, i32) {
    %c0_i32 = arith.constant 0 : i32
    %c0_i32_0 = arith.constant 0 : i32
    return %arg0, %arg1, %c0_i32 : i32, i32, i32
  }
  func.func @transform_1(%arg0: i32, %arg1: i32) -> (i32, i32) {
    %c0_i32 = arith.constant 0 : i32
    %c0_i32_0 = arith.constant 0 : i32
    %c0_i32_1 = arith.constant 0 : i32
    return %c0_i32, %c0_i32_0 : i32, i32
  }
  func.func @transform_2(%arg0: i32, %arg1: i32) -> (i32, i32) {
    %c0_i32 = arith.constant 0 : i32
    %c0_i32_0 = arith.constant 0 : i32
    %c0_i32_1 = arith.constant 0 : i32
    return %c0_i32, %c0_i32_0 : i32, i32
  }
  func.func @transform_3(%arg0: i32, %arg1: i32) -> (i32, i32) {
    %c0_i32 = arith.constant 0 : i32
    %c0_i32_0 = arith.constant 0 : i32
    %c0_i32_1 = arith.constant 0 : i32
    return %c0_i32, %c0_i32_0 : i32, i32
  }
  func.func @transform_4(%arg0: i32, %arg1: i32) -> (i32, i32) {
    %c0_i32 = arith.constant 0 : i32
    %c0_i32_0 = arith.constant 0 : i32
    %c0_i32_1 = arith.constant 0 : i32
    return %c0_i32, %c0_i32_0 : i32, i32
  }
  func.func @transform_5(%arg0: i32, %arg1: i32) -> (i32, i32, i32) {
    %c0_i32 = arith.constant 0 : i32
    %c0_i32_0 = arith.constant 0 : i32
    %c0_i32_1 = arith.constant 0 : i32
    return %arg0, %c0_i32, %c0_i32_0 : i32, i32, i32
  }
  func.func @transform_6(%arg0: i32, %arg1: i32) -> (i32, i32, i32) {
    %c0_i32 = arith.constant 0 : i32
    %c0_i32_0 = arith.constant 0 : i32
    %c0_i32_1 = arith.constant 0 : i32
    return %arg0, %c0_i32, %c0_i32_0 : i32, i32, i32
  }
}

</mosaic_0001>

<llo_original>
// kernel: image_model_forward.1
$region0: #{image_model_forward.1}
  #allocation0 [shape = 'u32[]', space=smem, size = 0x4, offset = 0x4, fixed_abs, tag = 'smem constant byte address 0x4 - core index']
  #allocation1 [shape = 'u32[144,128]{1,0:T(1,128)}', space=vmem, size = 0x12000, scoped, tag = 'internal scratch']
  #allocation2 [shape = 'f32[1,1024]{1,0:T(1,128)}', space=vmem, size = 0x1000, scoped, tag = 'scratch operand']
  %s0 = inlined_call_operand.vmem [shape: bf16[2,256,32], index: 0, kind: input, shape index: {}]
  %s1 = inlined_call_operand.vmem [shape: bf16[32,1024], index: 1, kind: input, shape index: {}]
  %s2 = inlined_call_operand.vmem [shape: f32[1,1024], index: 2, kind: input, shape index: {}]
  %s3 = inlined_call_operand.vmem [shape: bf16[1024,128], index: 3, kind: input, shape index: {}]
  %s4 = inlined_call_operand.vmem [shape: f32[1,128], index: 4, kind: input, shape index: {}]
  %s5 = inlined_call_operand.vmem [shape: f32[2,1,1024], index: 5, kind: output, shape index: {0}]
  %s6 = inlined_call_operand.hbm [shape: f32[2,1,128], index: 6, kind: output, shape index: {1}]
  %7 = xla_tuple %s5, %s6
  %s8 = sld [smem:[#allocation0]]
  $region69: #{image_model_forward.1} parent=0
    _
  %s10 = ssub.s32 1, %s8
  %s11 = scalar_select 0, %s10, %s8
  $region1: #{image_model_forward.1} parent=0
    #allocation3 [shape = 'u8[1024]{0}', space=vmem, size = 0x400, scoped, tag = 'output window, operand 1']
    #allocation4 [shape = 's32[2]{0}', space=sflag, size = 0x8, scoped, tag = 'scoped memory for image_model_forward.1']
    %12 = vsyncpa [#allocation4], 0
    %s13 = scalar_lea.sflag [#allocation4], 1
    %14 = vsyncpa %s13, 0
    loop: start=0, step=1, limit=4
    $region2: #{image_model_forward.1} parent=1 // loop_pre_header
      _
    $region3: #{image_model_forward.1} parent=1 // loop_header
      %s16 = sphi 0, %s20
      %p17 = scmp.ge.s32.totalorder %s16, 4
      %s23 = sphi 0, %s35
      %s24 = sphi 0, %s31
      %s25 = sphi 0, %s23
      %s26 = sphi 0, %s24
      %s27 = sphi 0, %s25
      %s28 = sphi 0, %s26
      %s40 = sphi 0, %s42
      %s43 = sphi 0, %s40
      %s44 = sphi 0, %s43
      %s60 = sphi 0, %s44
      %s64 = sphi 0, %s64
      %s66 = sphi 0, %s64
      %s67 = sphi 0, %s66
      %s81 = sphi 0, %s67
      %s85 = sphi 0, %s85
      %s87 = sphi 0, %s85
      %s88 = sphi 0, %s87
      %s102 = sphi 0, %s88
      %s106 = sphi 0, %s106
      %s108 = sphi 0, %s106
      %s109 = sphi 0, %s108
      %s123 = sphi 0, %s109
      %s127 = sphi 0, %s127
      %s129 = sphi 0, %s127
      %s130 = sphi 0, %s129
      %s144 = sphi 0, %s130
      %s150 = sphi 0, %s152
      %s153 = sphi 0, %s150
      %s154 = sphi 0, %s153
      %s170 = sphi 0, %s154
      %s176 = sphi 0, %s178
      %s179 = sphi 0, %s176
      %s180 = sphi 0, %s179
      %s196 = sphi 0, %s180
    $region4: #{image_model_forward.1} parent=1 // loop_header_branch
      %19 = sbr.rel (%p17) target = $region8
    $region5: #{image_model_forward.1} parent=1 // loop_body
      %s21 = ssub.s32 %s16, 1
      %s22 = ssub.s32 %s16, 2
      %s29 = sadd.s32 1, %s24
      %p30 = scmp.ge.s32.totalorder %s29, 1
      %s31 = scalar_select %p30, 0, %s29
      %s32 = sadd.s32 1, %s23
      %s33 = scalar_select %p30, %s32, %s23
      %p34 = scmp.ge.s32.totalorder %s33, 2
      %s35 = scalar_select %p34, 0, %s33
      %s36 = ssub.s32 %s23, %s35
      %s37 = ssub.s32 %s24, %s31
      %s38 = sor.u32 %s36, %s37
      %p39 = scmp.eq.s32.totalorder %s38, 0
      %s41 = sadd.s32 %s40, 1
      %s42 = scalar_select %p39, %s40, %s41
      %p45 = pneg %p39
      %p46 = scmp.eq.s32.totalorder %s16, 1
      %p47 = por %p45, %p46
      %p48 = scmp.ne.s32.totalorder %s40, %s43
      %p49 = scmp.eq.s32.totalorder %s16, 0
      %p50 = por %p48, %p49
      %p51 = scmp.ne.s32.totalorder %s40, %s43
      %p52 = scmp.eq.s32.totalorder %s21, 1
      %p53 = por %p51, %p52
      %p54 = scmp.ne.s32.totalorder %s43, %s44
      %p55 = scmp.eq.s32.totalorder %s21, 0
      %p56 = por %p54, %p55
      %p57 = scmp.ne.s32.totalorder %s43, %s44
      %p58 = scmp.eq.s32.totalorder %s22, 1
      %p59 = por %p57, %p58
      %p61 = scmp.ne.s32.totalorder %s44, %s60
      %p62 = scmp.eq.s32.totalorder %s22, 0
      %p63 = por %p61, %p62
      %s65 = sadd.s32 %s64, 1
      %p68 = scmp.eq.s32.totalorder %s16, 1
      %p69 = scmp.ne.s32.totalorder %s64, %s66
      %p70 = scmp.eq.s32.totalorder %s16, 0
      %p71 = por %p69, %p70
      %p72 = scmp.ne.s32.totalorder %s64, %s66
      %p73 = scmp.eq.s32.totalorder %s21, 1
      %p74 = por %p72, %p73
      %p75 = scmp.ne.s32.totalorder %s66, %s67
      %p76 = scmp.eq.s32.totalorder %s21, 0
      %p77 = por %p75, %p76
      %p78 = scmp.ne.s32.totalorder %s66, %s67
      %p79 = scmp.eq.s32.totalorder %s22, 1
      %p80 = por %p78, %p79
      %p82 = scmp.ne.s32.totalorder %s67, %s81
      %p83 = scmp.eq.s32.totalorder %s22, 0
      %p84 = por %p82, %p83
      %s86 = sadd.s32 %s85, 1
      %p89 = scmp.eq.s32.totalorder %s16, 1
      %p90 = scmp.ne.s32.totalorder %s85, %s87
      %p91 = scmp.eq.s32.totalorder %s16, 0
      %p92 = por %p90, %p91
      %p93 = scmp.ne.s32.totalorder %s85, %s87
      %p94 = scmp.eq.s32.totalorder %s21, 1
      %p95 = por %p93, %p94
      %p96 = scmp.ne.s32.totalorder %s87, %s88
      %p97 = scmp.eq.s32.totalorder %s21, 0
      %p98 = por %p96, %p97
      %p99 = scmp.ne.s32.totalorder %s87, %s88
      %p100 = scmp.eq.s32.totalorder %s22, 1
      %p101 = por %p99, %p100
      %p103 = scmp.ne.s32.totalorder %s88, %s102
      %p104 = scmp.eq.s32.totalorder %s22, 0
      %p105 = por %p103, %p104
      %s107 = sadd.s32 %s106, 1
      %p110 = scmp.eq.s32.totalorder %s16, 1
      %p111 = scmp.ne.s32.totalorder %s106, %s108
      %p112 = scmp.eq.s32.totalorder %s16, 0
      %p113 = por %p111, %p112
      %p114 = scmp.ne.s32.totalorder %s106, %s108
      %p115 = scmp.eq.s32.totalorder %s21, 1
      %p116 = por %p114, %p115
      %p117 = scmp.ne.s32.totalorder %s108, %s109
      %p118 = scmp.eq.s32.totalorder %s21, 0
      %p119 = por %p117, %p118
      %p120 = scmp.ne.s32.totalorder %s108, %s109
      %p121 = scmp.eq.s32.totalorder %s22, 1
      %p122 = por %p120, %p121
      %p124 = scmp.ne.s32.totalorder %s109, %s123
      %p125 = scmp.eq.s32.totalorder %s22, 0
      %p126 = por %p124, %p125
      %s128 = sadd.s32 %s127, 1
      %p131 = scmp.eq.s32.totalorder %s16, 1
      %p132 = scmp.ne.s32.totalorder %s127, %s129
      %p133 = scmp.eq.s32.totalorder %s16, 0
      %p134 = por %p132, %p133
      %p135 = scmp.ne.s32.totalorder %s127, %s129
      %p136 = scmp.eq.s32.totalorder %s21, 1
      %p137 = por %p135, %p136
      %p138 = scmp.ne.s32.totalorder %s129, %s130
      %p139 = scmp.eq.s32.totalorder %s21, 0
      %p140 = por %p138, %p139
      %p141 = scmp.ne.s32.totalorder %s129, %s130
      %p142 = scmp.eq.s32.totalorder %s22, 1
      %p143 = por %p141, %p142
      %p145 = scmp.ne.s32.totalorder %s130, %s144
      %p146 = scmp.eq.s32.totalorder %s22, 0
      %p147 = por %p145, %p146
      %s148 = ssub.s32 %s23, %s35
      %p149 = scmp.eq.s32.totalorder %s148, 0
      %s151 = sadd.s32 %s150, 1
      %s152 = scalar_select %p149, %s150, %s151
      %p155 = pneg %p149
      %p156 = scmp.eq.s32.totalorder %s16, 1
      %p157 = por %p155, %p156
      %p158 = scmp.ne.s32.totalorder %s150, %s153
      %p159 = scmp.eq.s32.totalorder %s16, 0
      %p160 = por %p158, %p159
      %p161 = scmp.ne.s32.totalorder %s150, %s153
      %p162 = scmp.eq.s32.totalorder %s21, 1
      %p163 = por %p161, %p162
      %p164 = scmp.ne.s32.totalorder %s153, %s154
      %p165 = scmp.eq.s32.totalorder %s21, 0
      %p166 = por %p164, %p165
      %p167 = scmp.ne.s32.totalorder %s153, %s154
      %p168 = scmp.eq.s32.totalorder %s22, 1
      %p169 = por %p167, %p168
      %p171 = scmp.ne.s32.totalorder %s154, %s170
      %p172 = scmp.eq.s32.totalorder %s22, 0
      %p173 = por %p171, %p172
      %s174 = ssub.s32 %s23, %s35
      %p175 = scmp.eq.s32.totalorder %s174, 0
      %s177 = sadd.s32 %s176, 1
      %s178 = scalar_select %p175, %s176, %s177
      %p181 = pneg %p175
      %p182 = scmp.eq.s32.totalorder %s16, 1
      %p183 = por %p181, %p182
      %p184 = scmp.ne.s32.totalorder %s176, %s179
      %p185 = scmp.eq.s32.totalorder %s16, 0
      %p186 = por %p184, %p185
      %p187 = scmp.ne.s32.totalorder %s176, %s179
      %p188 = scmp.eq.s32.totalorder %s21, 1
      %p189 = por %p187, %p188
      %p190 = scmp.ne.s32.totalorder %s179, %s180
      %p191 = scmp.eq.s32.totalorder %s21, 0
      %p192 = por %p190, %p191
      %p193 = scmp.ne.s32.totalorder %s179, %s180
      %p194 = scmp.eq.s32.totalorder %s22, 1
      %p195 = por %p193, %p194
      %p197 = scmp.ne.s32.totalorder %s180, %s196
      %p198 = scmp.eq.s32.totalorder %s22, 0
      %p199 = por %p197, %p198
      %p200 = scmp.le.s32.totalorder 1, %s16
      %p201 = scmp.lt.s32.totalorder %s16, 3
      %p202 = pnand %p200, %p201
      %p203 = pneg %p202
      // Predicated region
      $region9: #{image_model_forward.1} parent=5 // pred_check
        _
      $region10: #{image_model_forward.1} parent=5 // pred_check_branch
        %205 = sbr.rel (%p202) target = $region12
      $region11: #{image_model_forward.1} parent=5 // pred_region
        %s206 = ssub.s32 %s16, 1
        // Predicated region
        $region13: #{image_model_forward.1} parent=11 // pred_check
          %p207 = pneg %p77
        $region14: #{image_model_forward.1} parent=11 // pred_check_branch
          %209 = sbr.rel (%p207) target = $region16
        $region15: #{image_model_forward.1} parent=11 // pred_region
          _
        $region16: #{image_model_forward.1} parent=11 // pred_fallthru
          _
        // Predicated region
        $region17: #{image_model_forward.1} parent=11 // pred_check
          %p210 = pneg %p98
        $region18: #{image_model_forward.1} parent=11 // pred_check_branch
          %212 = sbr.rel (%p210) target = $region20
        $region19: #{image_model_forward.1} parent=11 // pred_region
          _
        $region20: #{image_model_forward.1} parent=11 // pred_fallthru
          _
        // Predicated region
        $region21: #{image_model_forward.1} parent=11 // pred_check
          %p213 = pneg %p119
        $region22: #{image_model_forward.1} parent=11 // pred_check_branch
          %215 = sbr.rel (%p213) target = $region24
        $region23: #{image_model_forward.1} parent=11 // pred_region
          _
        $region24: #{image_model_forward.1} parent=11 // pred_fallthru
          _
        // Predicated region
        $region25: #{image_model_forward.1} parent=11 // pred_check
          %p216 = pneg %p140
        $region26: #{image_model_forward.1} parent=11 // pred_check_branch
          %218 = sbr.rel (%p216) target = $region28
        $region27: #{image_model_forward.1} parent=11 // pred_region
          _
        $region28: #{image_model_forward.1} parent=11 // pred_fallthru
          _
      $region12: #{image_model_forward.1} parent=5 // pred_fallthru
        _
      %p219 = scmp.lt.s32.totalorder %s16, 2
      // Predicated region
      $region29: #{image_model_forward.1} parent=5 // pred_check
        %p220 = pneg %p219
      $region30: #{image_model_forward.1} parent=5 // pred_check_branch
        %222 = sbr.rel (%p220) target = $region32
      $region31: #{image_model_forward.1} parent=5 // pred_region
        // Predicated region
        $region33: #{image_model_forward.1} parent=31 // pred_check
          %p223 = pneg %p50
        $region34: #{image_model_forward.1} parent=31 // pred_check_branch
          %225 = sbr.rel (%p223) target = $region36
        $region35: #{image_model_forward.1} parent=31 // pred_region
          %s226 = smul.u32 32, %s24
          %p227 = scmp.lt.s32.totalorder %s23, 1
          %s228 = scalar_select %p227, %s23, 1
          %p229 = scmp.lt.s32.totalorder %s226, 31
          %s230 = scalar_select %p229, %s226, 31
          %s231 = smul.addr %s228, 32
          %s232 = sadd.s32 %s230, %s231
          %s233 = smul.addr %s232, 4
          %s234 = scalar_lea.vmem %s0, %s233
          %s235 = smul.u32 32, %s24
        $region36: #{image_model_forward.1} parent=31 // pred_fallthru
          _
      $region32: #{image_model_forward.1} parent=5 // pred_fallthru
        _
      %p236 = scmp.le.s32.totalorder 1, %s16
      %p237 = scmp.lt.s32.totalorder %s16, 3
      %p238 = pnand %p236, %p237
      %p239 = pneg %p238
      // Predicated region
      $region37: #{image_model_forward.1} parent=5 // pred_check
        _
      $region38: #{image_model_forward.1} parent=5 // pred_check_branch
        %241 = sbr.rel (%p238) target = $region40
      $region39: #{image_model_forward.1} parent=5 // pred_region
        %s242 = ssub.s32 %s16, 1
        %s243 = smul.u32 32, %s26
        %p244 = scmp.lt.s32.totalorder %s25, 1
        %s245 = scalar_select %p244, %s25, 1
        %p246 = scmp.lt.s32.totalorder %s243, 31
        %s247 = scalar_select %p246, %s243, 31
        %s248 = smul.addr %s245, 32
        %s249 = sadd.s32 %s247, %s248
        %s250 = smul.addr %s249, 4
        %s251 = scalar_lea.vmem %s0, %s250
        %p252 = pneg %p56
        %p253 = pneg %p53
        %p254 = pneg %p77
        %p255 = pneg %p74
        %p256 = pneg %p98
        %p257 = pneg %p95
        %p258 = pneg %p119
        %p259 = pneg %p116
        %p260 = pneg %p140
        %p261 = pneg %p137
        %p262 = pneg %p166
        %p263 = pneg %p163
        %p264 = scmp.lt.s32.totalorder %s25, 1
        %s265 = scalar_select %p264, %s25, 1
        %s266 = smul.addr %s265, 8
        %s267 = scalar_lea.vmem %s5, %s266
        %p268 = pneg %p192
        %p269 = pneg %p189
        %s270 = sand.u32 %s179, 1
        %s271 = scalar_lea.sflag [#allocation4], %s270
        %s272 = sand.u32 %s179, 1
        %s273 = scalar_lea.vmem [#allocation3], %s272
        %s274 = smul.u32 32, %s26
        %p275 = scmp.lt.s32.totalorder %s25, 1
        %s276 = scalar_select %p275, %s25, 1
        %p277 = scmp.lt.s32.totalorder %s274, 31
        %s278 = scalar_select %p277, %s274, 31
        %s279 = smul.addr %s276, 32
        %s280 = sadd.s32 %s278, %s279
        %s281 = smul.addr %s280, 4
        %s282 = scalar_lea.vmem %s0, %s281
        %s283 = smul.u32 32, %s26
        %p284 = scmp.lt.s32.totalorder %s25, 1
        %s285 = scalar_select %p284, %s25, 1
        %s286 = smul.addr %s285, 8
        %s287 = scalar_lea.vmem %s5, %s286
        %p289 = scmp.eq.s32.totalorder %s26, 0
        // Predicated region
        $region41: #{image_model_forward.1} parent=39 // pred_check
          %p290 = pneg %p289
        $region42: #{image_model_forward.1} parent=39 // pred_check_branch
          %292 = sbr.rel (%p290) target = $region44
        $region43: #{image_model_forward.1} parent=39 // pred_region
          %293 = vst [vmem:[#allocation2] sm:$0xff] 0.0
        $region44: #{image_model_forward.1} parent=39 // pred_fallthru
          _
        %v294 = vld [vmem:[%s282] sm:$0xf]
        %v295 = vld [vmem:[%s282 + $0x4] sm:$0xf]
        %v296 = vld [vmem:[%s282 + $0x8] sm:$0xf]
        %v297 = vld [vmem:[%s282 + $0xc] sm:$0xf]
        %v298 = vld [vmem:[%s282 + $0x10] sm:$0xf]
        %v299 = vld [vmem:[%s282 + $0x14] sm:$0xf]
        %v300 = vld [vmem:[%s282 + $0x18] sm:$0xf]
        %v301 = vld [vmem:[%s282 + $0x1c] sm:$0xf]
        %v302 = vld [vmem:[%s282 + $0x20] sm:$0xf]
        %v303 = vld [vmem:[%s282 + $0x24] sm:$0xf]
        %v304 = vld [vmem:[%s282 + $0x28] sm:$0xf]
        %v305 = vld [vmem:[%s282 + $0x2c] sm:$0xf]
        %v306 = vld [vmem:[%s282 + $0x30] sm:$0xf]
        %v307 = vld [vmem:[%s282 + $0x34] sm:$0xf]
        %v308 = vld [vmem:[%s282 + $0x38] sm:$0xf]
        %v309 = vld [vmem:[%s282 + $0x3c] sm:$0xf]
        %v310 = vld [vmem:[%s1] sm:$0xff]
        %v311 = vld [vmem:[%s1 + $0x8] sm:$0xff]
        %v312 = vld [vmem:[%s1 + $0x10] sm:$0xff]
        %v313 = vld [vmem:[%s1 + $0x18] sm:$0xff]
        %v314 = vld [vmem:[%s1 + $0x20] sm:$0xff]
        %v315 = vld [vmem:[%s1 + $0x28] sm:$0xff]
        %v316 = vld [vmem:[%s1 + $0x30] sm:$0xff]
        %v317 = vld [vmem:[%s1 + $0x38] sm:$0xff]
        %v318 = vld [vmem:[%s1 + $0x40] sm:$0xff]
        %v319 = vld [vmem:[%s1 + $0x48] sm:$0xff]
        %v320 = vld [vmem:[%s1 + $0x50] sm:$0xff]
        %v321 = vld [vmem:[%s1 + $0x58] sm:$0xff]
        %v322 = vld [vmem:[%s1 + $0x60] sm:$0xff]
        %v323 = vld [vmem:[%s1 + $0x68] sm:$0xff]
        %v324 = vld [vmem:[%s1 + $0x70] sm:$0xff]
        %v325 = vld [vmem:[%s1 + $0x78] sm:$0xff]
        %v326 = vld [vmem:[%s2] sm:$0xff]
        %v328 = vlaneseq
        %v329 = vshrl.u32 %v328, 7
        %v330 = vsub.s32 0, %v329
        %v331 = vrot.slane %v326, %v330
        %v332 = vlaneseq
        %v333 = vshrl.u32 %v332, 7
        %v334 = vsub.s32 1, %v333
        %v335 = vrot.slane %v326, %v334
        %v336 = vlaneseq
        %v337 = vshrl.u32 %v336, 7
        %v338 = vsub.s32 2, %v337
        %v339 = vrot.slane %v326, %v338
        %v340 = vlaneseq
        %v341 = vshrl.u32 %v340, 7
        %v342 = vsub.s32 3, %v341
        %v343 = vrot.slane %v326, %v342
        %v344 = vlaneseq
        %v345 = vshrl.u32 %v344, 7
        %v346 = vsub.s32 4, %v345
        %v347 = vrot.slane %v326, %v346
        %v348 = vlaneseq
        %v349 = vshrl.u32 %v348, 7
        %v350 = vsub.s32 5, %v349
        %v351 = vrot.slane %v326, %v350
        %v352 = vlaneseq
        %v353 = vshrl.u32 %v352, 7
        %v354 = vsub.s32 6, %v353
        %v355 = vrot.slane %v326, %v354
        %v356 = vlaneseq
        %v357 = vshrl.u32 %v356, 7
        %v358 = vsub.s32 7, %v357
        %v359 = vrot.slane %v326, %v358
        %v384 = vunpack.c.l.b16 %v294
        %v385 = vunpack.c.l.b16 %v295
        %v386 = vunpack.c.l.b16 %v296
        %v387 = vunpack.c.l.b16 %v297
        %v388 = vunpack.c.l.b16 %v298
        %v389 = vunpack.c.l.b16 %v299
        %v390 = vunpack.c.l.b16 %v300
        %v391 = vunpack.c.l.b16 %v301
        %v392 = vunpack.c.l.b16 %v302
        %v393 = vunpack.c.l.b16 %v303
        %v394 = vunpack.c.l.b16 %v304
        %v395 = vunpack.c.l.b16 %v305
        %v396 = vunpack.c.l.b16 %v306
        %v397 = vunpack.c.l.b16 %v307
        %v398 = vunpack.c.l.b16 %v308
        %v399 = vunpack.c.l.b16 %v309
        %v400 = vpack.c.b16 %v385, %v384
        %v401 = vpack.c.b16 %v387, %v386
        %v402 = vpack.c.b16 %v389, %v388
        %v403 = vpack.c.b16 %v391, %v390
        %v404 = vpack.c.b16 %v393, %v392
        %v405 = vpack.c.b16 %v395, %v394
        %v406 = vpack.c.b16 %v397, %v396
        %v407 = vpack.c.b16 %v399, %v398
        %v424 = vunpack.c.l.b16 %v310
        %v425 = vunpack.c.h.b16 %v310
        %v426 = vunpack.c.l.b16 %v311
        %v427 = vunpack.c.h.b16 %v311
        %v428 = vunpack.c.l.b16 %v312
        %v429 = vunpack.c.h.b16 %v312
        %v430 = vunpack.c.l.b16 %v313
        %v431 = vunpack.c.h.b16 %v313
        %v432 = vunpack.c.l.b16 %v314
        %v433 = vunpack.c.h.b16 %v314
        %v434 = vunpack.c.l.b16 %v315
        %v435 = vunpack.c.h.b16 %v315
        %v436 = vunpack.c.l.b16 %v316
        %v437 = vunpack.c.h.b16 %v316
        %v438 = vunpack.c.l.b16 %v317
        %v439 = vunpack.c.h.b16 %v317
        %v440 = vunpack.c.l.b16 %v318
        %v441 = vunpack.c.h.b16 %v318
        %v442 = vunpack.c.l.b16 %v319
        %v443 = vunpack.c.h.b16 %v319
        %v444 = vunpack.c.l.b16 %v320
        %v445 = vunpack.c.h.b16 %v320
        %v446 = vunpack.c.l.b16 %v321
        %v447 = vunpack.c.h.b16 %v321
        %v448 = vunpack.c.l.b16 %v322
        %v449 = vunpack.c.h.b16 %v322
        %v450 = vunpack.c.l.b16 %v323
        %v451 = vunpack.c.h.b16 %v323
        %v452 = vunpack.c.l.b16 %v324
        %v453 = vunpack.c.h.b16 %v324
        %v454 = vunpack.c.l.b16 %v325
        %v455 = vunpack.c.h.b16 %v325
        %v456 = vpack.c.b16 %v432, %v424
        %v457 = vpack.c.b16 %v433, %v425
        %v458 = vpack.c.b16 %v434, %v426
        %v459 = vpack.c.b16 %v435, %v427
        %v460 = vpack.c.b16 %v436, %v428
        %v461 = vpack.c.b16 %v437, %v429
        %v462 = vpack.c.b16 %v438, %v430
        %v463 = vpack.c.b16 %v439, %v431
        %v464 = vpack.c.b16 %v448, %v440
        %v465 = vpack.c.b16 %v449, %v441
        %v466 = vpack.c.b16 %v450, %v442
        %v467 = vpack.c.b16 %v451, %v443
        %v468 = vpack.c.b16 %v452, %v444
        %v469 = vpack.c.b16 %v453, %v445
        %v470 = vpack.c.b16 %v454, %v446
        %v471 = vpack.c.b16 %v455, %v447
        %vm488 = vcmask 261120
        %v490 = vsel %vm488, %v400, 0
        %v493 = vsel %vm488, %v401, 0
        %v496 = vsel %vm488, %v402, 0
        %v499 = vsel %vm488, %v403, 0
        %v502 = vsel %vm488, %v404, 0
        %v505 = vsel %vm488, %v405, 0
        %v508 = vsel %vm488, %v406, 0
        %v511 = vsel %vm488, %v407, 0
        %513 = vmatprep.subr.bf16.mxu0 0
        %514 = vmatpush1.bf16.msra.mxu0 0
        %515 = vmatprep.subr.bf16.mxu0 0
        %516 = vmatpush1.bf16.msra.mxu0 0
        %517 = vmatprep.subr.bf16.mxu0 0
        %518 = vmatpush1.bf16.msra.mxu0 0
        %519 = vmatprep.subr.bf16.mxu0 0
        %520 = vmatpush1.bf16.msra.mxu0 0
        %521 = vmatprep.subr.bf16.mxu0 0
        %522 = vmatpush1.bf16.msra.mxu0 0
        %523 = vmatprep.subr.bf16.mxu0 0
        %524 = vmatpush1.bf16.msra.mxu0 0
        %525 = vmatprep.subr.bf16.mxu0 %v465
        %526 = vmatpush1.bf16.msra.mxu0 %v464
        %527 = vmatprep.subr.bf16.mxu0 %v457
        %528 = vmatpush1.bf16.msra.mxu0 %v456
        %529 = vmatprep.subr.bf16.mxu0 0
        %530 = vmatpush2.bf16.msra.mxu0 0
        %531 = vmatprep.subr.bf16.mxu0 0
        %532 = vmatpush2.bf16.msra.mxu0 0
        %533 = vmatprep.subr.bf16.mxu0 0
        %534 = vmatpush2.bf16.msra.mxu0 0
        %535 = vmatprep.subr.bf16.mxu0 0
        %536 = vmatpush2.bf16.msra.mxu0 0
        %537 = vmatprep.subr.bf16.mxu0 0
        %538 = vmatpush2.bf16.msra.mxu0 0
        %539 = vmatprep.subr.bf16.mxu0 0
        %540 = vmatpush2.bf16.msra.mxu0 0
        %541 = vmatprep.subr.bf16.mxu0 0
        %542 = vmatpush2.bf16.msra.mxu0 0
        %543 = vmatprep.subr.bf16.mxu0 0
        %544 = vmatpush2.bf16.msra.mxu0 0
        %545 = vmatprep.mubr.bf16.mxu0 0
        %546 = vmatmul.mubr.bf16.gmra.mxu0 %v490
        %v547 = vpop.f32.mrf.mxu0
        %v548 = vadd.f32 %v331, %v547
        %v549 = vpop.f32.mrf.mxu0
        %v550 = vadd.f32 %v335, %v549
        %v551 = vpop.f32.mrf.mxu0
        %v552 = vadd.f32 %v331, %v551
        %v553 = vpop.f32.mrf.mxu0
        %v554 = vadd.f32 %v335, %v553
        %555 = vmatprep.mubr.bf16.mxu0 0
        %556 = vmatmul.mubr.bf16.gmra.mxu0 %v493
        %v557 = vpop.f32.mrf.mxu0
        %v558 = vadd.f32 %v331, %v557
        %v559 = vpop.f32.mrf.mxu0
        %v560 = vadd.f32 %v335, %v559
        %v561 = vpop.f32.mrf.mxu0
        %v562 = vadd.f32 %v331, %v561
        %v563 = vpop.f32.mrf.mxu0
        %v564 = vadd.f32 %v335, %v563
        %565 = vmatprep.mubr.bf16.mxu0 0
        %566 = vmatmul.mubr.bf16.gmra.mxu0 %v496
        %v567 = vpop.f32.mrf.mxu0
        %v568 = vadd.f32 %v331, %v567
        %v569 = vpop.f32.mrf.mxu0
        %v570 = vadd.f32 %v335, %v569
        %v571 = vpop.f32.mrf.mxu0
        %v572 = vadd.f32 %v331, %v571
        %v573 = vpop.f32.mrf.mxu0
        %v574 = vadd.f32 %v335, %v573
        %575 = vmatprep.mubr.bf16.mxu0 0
        %576 = vmatmul.mubr.bf16.gmra.mxu0 %v499
        %v577 = vpop.f32.mrf.mxu0
        %v578 = vadd.f32 %v331, %v577
        %v579 = vpop.f32.mrf.mxu0
        %v580 = vadd.f32 %v335, %v579
        %v581 = vpop.f32.mrf.mxu0
        %v582 = vadd.f32 %v331, %v581
        %v583 = vpop.f32.mrf.mxu0
        %v584 = vadd.f32 %v335, %v583
        %585 = vmatprep.mubr.bf16.mxu0 0
        %586 = vmatmul.mubr.bf16.gmra.mxu0 %v502
        %v587 = vpop.f32.mrf.mxu0
        %v588 = vadd.f32 %v331, %v587
        %v589 = vpop.f32.mrf.mxu0
        %v590 = vadd.f32 %v335, %v589
        %v591 = vpop.f32.mrf.mxu0
        %v592 = vadd.f32 %v331, %v591
        %v593 = vpop.f32.mrf.mxu0
        %v594 = vadd.f32 %v335, %v593
        %595 = vmatprep.mubr.bf16.mxu0 0
        %596 = vmatmul.mubr.bf16.gmra.mxu0 %v505
        %v597 = vpop.f32.mrf.mxu0
        %v598 = vadd.f32 %v331, %v597
        %v599 = vpop.f32.mrf.mxu0
        %v600 = vadd.f32 %v335, %v599
        %v601 = vpop.f32.mrf.mxu0
        %v602 = vadd.f32 %v331, %v601
        %v603 = vpop.f32.mrf.mxu0
        %v604 = vadd.f32 %v335, %v603
        %605 = vmatprep.mubr.bf16.mxu0 0
        %606 = vmatmul.mubr.bf16.gmra.mxu0 %v508
        %v607 = vpop.f32.mrf.mxu0
        %v608 = vadd.f32 %v331, %v607
        %v609 = vpop.f32.mrf.mxu0
        %v610 = vadd.f32 %v335, %v609
        %v611 = vpop.f32.mrf.mxu0
        %v612 = vadd.f32 %v331, %v611
        %v613 = vpop.f32.mrf.mxu0
        %v614 = vadd.f32 %v335, %v613
        %615 = vmatprep.mubr.bf16.mxu0 0
        %616 = vmatmul.mubr.bf16.gmra.mxu0 %v511
        %v617 = vpop.f32.mrf.mxu0
        %v618 = vadd.f32 %v331, %v617
        %v619 = vpop.f32.mrf.mxu0
        %v620 = vadd.f32 %v335, %v619
        %v621 = vpop.f32.mrf.mxu0
        %v622 = vadd.f32 %v331, %v621
        %v623 = vpop.f32.mrf.mxu0
        %v624 = vadd.f32 %v335, %v623
        %625 = vdwg.mxu0
        %626 = vmatprep.subr.bf16.mxu0 0
        %627 = vmatpush1.bf16.msra.mxu0 0
        %628 = vmatprep.subr.bf16.mxu0 0
        %629 = vmatpush1.bf16.msra.mxu0 0
        %630 = vmatprep.subr.bf16.mxu0 0
        %631 = vmatpush1.bf16.msra.mxu0 0
        %632 = vmatprep.subr.bf16.mxu0 0
        %633 = vmatpush1.bf16.msra.mxu0 0
        %634 = vmatprep.subr.bf16.mxu0 0
        %635 = vmatpush1.bf16.msra.mxu0 0
        %636 = vmatprep.subr.bf16.mxu0 0
        %637 = vmatpush1.bf16.msra.mxu0 0
        %638 = vmatprep.subr.bf16.mxu0 %v467
        %639 = vmatpush1.bf16.msra.mxu0 %v466
        %640 = vmatprep.subr.bf16.mxu0 %v459
        %641 = vmatpush1.bf16.msra.mxu0 %v458
        %642 = vmatprep.subr.bf16.mxu0 0
        %643 = vmatpush2.bf16.msra.mxu0 0
        %644 = vmatprep.subr.bf16.mxu0 0
        %645 = vmatpush2.bf16.msra.mxu0 0
        %646 = vmatprep.subr.bf16.mxu0 0
        %647 = vmatpush2.bf16.msra.mxu0 0
        %648 = vmatprep.subr.bf16.mxu0 0
        %649 = vmatpush2.bf16.msra.mxu0 0
        %650 = vmatprep.subr.bf16.mxu0 0
        %651 = vmatpush2.bf16.msra.mxu0 0
        %652 = vmatprep.subr.bf16.mxu0 0
        %653 = vmatpush2.bf16.msra.mxu0 0
        %654 = vmatprep.subr.bf16.mxu0 0
        %655 = vmatpush2.bf16.msra.mxu0 0
        %656 = vmatprep.subr.bf16.mxu0 0
        %657 = vmatpush2.bf16.msra.mxu0 0
        %658 = vmatprep.mubr.bf16.mxu0 0
        %659 = vmatmul.mubr.bf16.gmra.mxu0 %v490
        %v660 = vpop.f32.mrf.mxu0
        %v661 = vadd.f32 %v339, %v660
        %v662 = vpop.f32.mrf.mxu0
        %v663 = vadd.f32 %v343, %v662
        %v664 = vpop.f32.mrf.mxu0
        %v665 = vadd.f32 %v339, %v664
        %v666 = vpop.f32.mrf.mxu0
        %v667 = vadd.f32 %v343, %v666
        %668 = vmatprep.mubr.bf16.mxu0 0
        %669 = vmatmul.mubr.bf16.gmra.mxu0 %v493
        %v670 = vpop.f32.mrf.mxu0
        %v671 = vadd.f32 %v339, %v670
        %v672 = vpop.f32.mrf.mxu0
        %v673 = vadd.f32 %v343, %v672
        %v674 = vpop.f32.mrf.mxu0
        %v675 = vadd.f32 %v339, %v674
        %v676 = vpop.f32.mrf.mxu0
        %v677 = vadd.f32 %v343, %v676
        %678 = vmatprep.mubr.bf16.mxu0 0
        %679 = vmatmul.mubr.bf16.gmra.mxu0 %v496
        %v680 = vpop.f32.mrf.mxu0
        %v681 = vadd.f32 %v339, %v680
        %v682 = vpop.f32.mrf.mxu0
        %v683 = vadd.f32 %v343, %v682
        %v684 = vpop.f32.mrf.mxu0
        %v685 = vadd.f32 %v339, %v684
        %v686 = vpop.f32.mrf.mxu0
        %v687 = vadd.f32 %v343, %v686
        %688 = vmatprep.mubr.bf16.mxu0 0
        %689 = vmatmul.mubr.bf16.gmra.mxu0 %v499
        %v690 = vpop.f32.mrf.mxu0
        %v691 = vadd.f32 %v339, %v690
        %v692 = vpop.f32.mrf.mxu0
        %v693 = vadd.f32 %v343, %v692
        %v694 = vpop.f32.mrf.mxu0
        %v695 = vadd.f32 %v339, %v694
        %v696 = vpop.f32.mrf.mxu0
        %v697 = vadd.f32 %v343, %v696
        %698 = vmatprep.mubr.bf16.mxu0 0
        %699 = vmatmul.mubr.bf16.gmra.mxu0 %v502
        %v700 = vpop.f32.mrf.mxu0
        %v701 = vadd.f32 %v339, %v700
        %v702 = vpop.f32.mrf.mxu0
        %v703 = vadd.f32 %v343, %v702
        %v704 = vpop.f32.mrf.mxu0
        %v705 = vadd.f32 %v339, %v704
        %v706 = vpop.f32.mrf.mxu0
        %v707 = vadd.f32 %v343, %v706
        %708 = vmatprep.mubr.bf16.mxu0 0
        %709 = vmatmul.mubr.bf16.gmra.mxu0 %v505
        %v710 = vpop.f32.mrf.mxu0
        %v711 = vadd.f32 %v339, %v710
        %v712 = vpop.f32.mrf.mxu0
        %v713 = vadd.f32 %v343, %v712
        %v714 = vpop.f32.mrf.mxu0
        %v715 = vadd.f32 %v339, %v714
        %v716 = vpop.f32.mrf.mxu0
        %v717 = vadd.f32 %v343, %v716
        %718 = vmatprep.mubr.bf16.mxu0 0
        %719 = vmatmul.mubr.bf16.gmra.mxu0 %v508
        %v720 = vpop.f32.mrf.mxu0
        %v721 = vadd.f32 %v339, %v720
        %v722 = vpop.f32.mrf.mxu0
        %v723 = vadd.f32 %v343, %v722
        %v724 = vpop.f32.mrf.mxu0
        %v725 = vadd.f32 %v339, %v724
        %v726 = vpop.f32.mrf.mxu0
        %v727 = vadd.f32 %v343, %v726
        %728 = vmatprep.mubr.bf16.mxu0 0
        %729 = vmatmul.mubr.bf16.gmra.mxu0 %v511
        %v730 = vpop.f32.mrf.mxu0
        %v731 = vadd.f32 %v339, %v730
        %v732 = vpop.f32.mrf.mxu0
        %v733 = vadd.f32 %v343, %v732
        %v734 = vpop.f32.mrf.mxu0
        %v735 = vadd.f32 %v339, %v734
        %v736 = vpop.f32.mrf.mxu0
        %v737 = vadd.f32 %v343, %v736
        %738 = vdwg.mxu0
        %739 = vmatprep.subr.bf16.mxu0 0
        %740 = vmatpush1.bf16.msra.mxu0 0
        %741 = vmatprep.subr.bf16.mxu0 0
        %742 = vmatpush1.bf16.msra.mxu0 0
        %743 = vmatprep.subr.bf16.mxu0 0
        %744 = vmatpush1.bf16.msra.mxu0 0
        %745 = vmatprep.subr.bf16.mxu0 0
        %746 = vmatpush1.bf16.msra.mxu0 0
        %747 = vmatprep.subr.bf16.mxu0 0
        %748 = vmatpush1.bf16.msra.mxu0 0
        %749 = vmatprep.subr.bf16.mxu0 0
        %750 = vmatpush1.bf16.msra.mxu0 0
        %751 = vmatprep.subr.bf16.mxu0 %v469
        %752 = vmatpush1.bf16.msra.mxu0 %v468
        %753 = vmatprep.subr.bf16.mxu0 %v461
        %754 = vmatpush1.bf16.msra.mxu0 %v460
        %755 = vmatprep.subr.bf16.mxu0 0
        %756 = vmatpush2.bf16.msra.mxu0 0
        %757 = vmatprep.subr.bf16.mxu0 0
        %758 = vmatpush2.bf16.msra.mxu0 0
        %759 = vmatprep.subr.bf16.mxu0 0
        %760 = vmatpush2.bf16.msra.mxu0 0
        %761 = vmatprep.subr.bf16.mxu0 0
        %762 = vmatpush2.bf16.msra.mxu0 0
        %763 = vmatprep.subr.bf16.mxu0 0
        %764 = vmatpush2.bf16.msra.mxu0 0
        %765 = vmatprep.subr.bf16.mxu0 0
        %766 = vmatpush2.bf16.msra.mxu0 0
        %767 = vmatprep.subr.bf16.mxu0 0
        %768 = vmatpush2.bf16.msra.mxu0 0
        %769 = vmatprep.subr.bf16.mxu0 0
        %770 = vmatpush2.bf16.msra.mxu0 0
        %771 = vmatprep.mubr.bf16.mxu0 0
        %772 = vmatmul.mubr.bf16.gmra.mxu0 %v490
        %v773 = vpop.f32.mrf.mxu0
        %v774 = vadd.f32 %v347, %v773
        %v775 = vpop.f32.mrf.mxu0
        %v776 = vadd.f32 %v351, %v775
        %v777 = vpop.f32.mrf.mxu0
        %v778 = vadd.f32 %v347, %v777
        %v779 = vpop.f32.mrf.mxu0
        %v780 = vadd.f32 %v351, %v779
        %781 = vmatprep.mubr.bf16.mxu0 0
        %782 = vmatmul.mubr.bf16.gmra.mxu0 %v493
        %v783 = vpop.f32.mrf.mxu0
        %v784 = vadd.f32 %v347, %v783
        %v785 = vpop.f32.mrf.mxu0
        %v786 = vadd.f32 %v351, %v785
        %v787 = vpop.f32.mrf.mxu0
        %v788 = vadd.f32 %v347, %v787
        %v789 = vpop.f32.mrf.mxu0
        %v790 = vadd.f32 %v351, %v789
        %791 = vmatprep.mubr.bf16.mxu0 0
        %792 = vmatmul.mubr.bf16.gmra.mxu0 %v496
        %v793 = vpop.f32.mrf.mxu0
        %v794 = vadd.f32 %v347, %v793
        %v795 = vpop.f32.mrf.mxu0
        %v796 = vadd.f32 %v351, %v795
        %v797 = vpop.f32.mrf.mxu0
        %v798 = vadd.f32 %v347, %v797
        %v799 = vpop.f32.mrf.mxu0
        %v800 = vadd.f32 %v351, %v799
        %801 = vmatprep.mubr.bf16.mxu0 0
        %802 = vmatmul.mubr.bf16.gmra.mxu0 %v499
        %v803 = vpop.f32.mrf.mxu0
        %v804 = vadd.f32 %v347, %v803
        %v805 = vpop.f32.mrf.mxu0
        %v806 = vadd.f32 %v351, %v805
        %v807 = vpop.f32.mrf.mxu0
        %v808 = vadd.f32 %v347, %v807
        %v809 = vpop.f32.mrf.mxu0
        %v810 = vadd.f32 %v351, %v809
        %811 = vmatprep.mubr.bf16.mxu0 0
        %812 = vmatmul.mubr.bf16.gmra.mxu0 %v502
        %v813 = vpop.f32.mrf.mxu0
        %v814 = vadd.f32 %v347, %v813
        %v815 = vpop.f32.mrf.mxu0
        %v816 = vadd.f32 %v351, %v815
        %v817 = vpop.f32.mrf.mxu0
        %v818 = vadd.f32 %v347, %v817
        %v819 = vpop.f32.mrf.mxu0
        %v820 = vadd.f32 %v351, %v819
        %821 = vmatprep.mubr.bf16.mxu0 0
        %822 = vmatmul.mubr.bf16.gmra.mxu0 %v505
        %v823 = vpop.f32.mrf.mxu0
        %v824 = vadd.f32 %v347, %v823
        %v825 = vpop.f32.mrf.mxu0
        %v826 = vadd.f32 %v351, %v825
        %v827 = vpop.f32.mrf.mxu0
        %v828 = vadd.f32 %v347, %v827
        %v829 = vpop.f32.mrf.mxu0
        %v830 = vadd.f32 %v351, %v829
        %831 = vmatprep.mubr.bf16.mxu0 0
        %832 = vmatmul.mubr.bf16.gmra.mxu0 %v508
        %v833 = vpop.f32.mrf.mxu0
        %v834 = vadd.f32 %v347, %v833
        %v835 = vpop.f32.mrf.mxu0
        %v836 = vadd.f32 %v351, %v835
        %v837 = vpop.f32.mrf.mxu0
        %v838 = vadd.f32 %v347, %v837
        %v839 = vpop.f32.mrf.mxu0
        %v840 = vadd.f32 %v351, %v839
        %841 = vmatprep.mubr.bf16.mxu0 0
        %842 = vmatmul.mubr.bf16.gmra.mxu0 %v511
        %v843 = vpop.f32.mrf.mxu0
        %v844 = vadd.f32 %v347, %v843
        %v845 = vpop.f32.mrf.mxu0
        %v846 = vadd.f32 %v351, %v845
        %v847 = vpop.f32.mrf.mxu0
        %v848 = vadd.f32 %v347, %v847
        %v849 = vpop.f32.mrf.mxu0
        %v850 = vadd.f32 %v351, %v849
        %851 = vdwg.mxu0
        %852 = vmatprep.subr.bf16.mxu0 0
        %853 = vmatpush1.bf16.msra.mxu0 0
        %854 = vmatprep.subr.bf16.mxu0 0
        %855 = vmatpush1.bf16.msra.mxu0 0
        %856 = vmatprep.subr.bf16.mxu0 0
        %857 = vmatpush1.bf16.msra.mxu0 0
        %858 = vmatprep.subr.bf16.mxu0 0
        %859 = vmatpush1.bf16.msra.mxu0 0
        %860 = vmatprep.subr.bf16.mxu0 0
        %861 = vmatpush1.bf16.msra.mxu0 0
        %862 = vmatprep.subr.bf16.mxu0 0
        %863 = vmatpush1.bf16.msra.mxu0 0
        %864 = vmatprep.subr.bf16.mxu0 %v471
        %865 = vmatpush1.bf16.msra.mxu0 %v470
        %866 = vmatprep.subr.bf16.mxu0 %v463
        %867 = vmatpush1.bf16.msra.mxu0 %v462
        %868 = vmatprep.subr.bf16.mxu0 0
        %869 = vmatpush2.bf16.msra.mxu0 0
        %870 = vmatprep.subr.bf16.mxu0 0
        %871 = vmatpush2.bf16.msra.mxu0 0
        %872 = vmatprep.subr.bf16.mxu0 0
        %873 = vmatpush2.bf16.msra.mxu0 0
        %874 = vmatprep.subr.bf16.mxu0 0
        %875 = vmatpush2.bf16.msra.mxu0 0
        %876 = vmatprep.subr.bf16.mxu0 0
        %877 = vmatpush2.bf16.msra.mxu0 0
        %878 = vmatprep.subr.bf16.mxu0 0
        %879 = vmatpush2.bf16.msra.mxu0 0
        %880 = vmatprep.subr.bf16.mxu0 0
        %881 = vmatpush2.bf16.msra.mxu0 0
        %882 = vmatprep.subr.bf16.mxu0 0
        %883 = vmatpush2.bf16.msra.mxu0 0
        %884 = vmatprep.mubr.bf16.mxu0 0
        %885 = vmatmul.mubr.bf16.gmra.mxu0 %v490
        %v886 = vpop.f32.mrf.mxu0
        %v887 = vadd.f32 %v355, %v886
        %v888 = vpop.f32.mrf.mxu0
        %v889 = vadd.f32 %v359, %v888
        %v890 = vpop.f32.mrf.mxu0
        %v891 = vadd.f32 %v355, %v890
        %v892 = vpop.f32.mrf.mxu0
        %v893 = vadd.f32 %v359, %v892
        %894 = vmatprep.mubr.bf16.mxu0 0
        %895 = vmatmul.mubr.bf16.gmra.mxu0 %v493
        %v896 = vpop.f32.mrf.mxu0
        %v897 = vadd.f32 %v355, %v896
        %v898 = vpop.f32.mrf.mxu0
        %v899 = vadd.f32 %v359, %v898
        %v900 = vpop.f32.mrf.mxu0
        %v901 = vadd.f32 %v355, %v900
        %v902 = vpop.f32.mrf.mxu0
        %v903 = vadd.f32 %v359, %v902
        %904 = vmatprep.mubr.bf16.mxu0 0
        %905 = vmatmul.mubr.bf16.gmra.mxu0 %v496
        %v906 = vpop.f32.mrf.mxu0
        %v907 = vadd.f32 %v355, %v906
        %v908 = vpop.f32.mrf.mxu0
        %v909 = vadd.f32 %v359, %v908
        %v910 = vpop.f32.mrf.mxu0
        %v911 = vadd.f32 %v355, %v910
        %v912 = vpop.f32.mrf.mxu0
        %v913 = vadd.f32 %v359, %v912
        %914 = vmatprep.mubr.bf16.mxu0 0
        %915 = vmatmul.mubr.bf16.gmra.mxu0 %v499
        %v916 = vpop.f32.mrf.mxu0
        %v917 = vadd.f32 %v355, %v916
        %v918 = vpop.f32.mrf.mxu0
        %v919 = vadd.f32 %v359, %v918
        %v920 = vpop.f32.mrf.mxu0
        %v921 = vadd.f32 %v355, %v920
        %v922 = vpop.f32.mrf.mxu0
        %v923 = vadd.f32 %v359, %v922
        %924 = vmatprep.mubr.bf16.mxu0 0
        %925 = vmatmul.mubr.bf16.gmra.mxu0 %v502
        %v926 = vpop.f32.mrf.mxu0
        %v927 = vadd.f32 %v355, %v926
        %v928 = vpop.f32.mrf.mxu0
        %v929 = vadd.f32 %v359, %v928
        %v930 = vpop.f32.mrf.mxu0
        %v931 = vadd.f32 %v355, %v930
        %v932 = vpop.f32.mrf.mxu0
        %v933 = vadd.f32 %v359, %v932
        %934 = vmatprep.mubr.bf16.mxu0 0
        %935 = vmatmul.mubr.bf16.gmra.mxu0 %v505
        %v936 = vpop.f32.mrf.mxu0
        %v937 = vadd.f32 %v355, %v936
        %v938 = vpop.f32.mrf.mxu0
        %v939 = vadd.f32 %v359, %v938
        %v940 = vpop.f32.mrf.mxu0
        %v941 = vadd.f32 %v355, %v940
        %v942 = vpop.f32.mrf.mxu0
        %v943 = vadd.f32 %v359, %v942
        %944 = vmatprep.mubr.bf16.mxu0 0
        %945 = vmatmul.mubr.bf16.gmra.mxu0 %v508
        %v946 = vpop.f32.mrf.mxu0
        %v947 = vadd.f32 %v355, %v946
        %v948 = vpop.f32.mrf.mxu0
        %v949 = vadd.f32 %v359, %v948
        %v950 = vpop.f32.mrf.mxu0
        %v951 = vadd.f32 %v355, %v950
        %v952 = vpop.f32.mrf.mxu0
        %v953 = vadd.f32 %v359, %v952
        %954 = vmatprep.mubr.bf16.mxu0 0
        %955 = vmatmul.mubr.bf16.gmra.mxu0 %v511
        %v956 = vpop.f32.mrf.mxu0
        %v957 = vadd.f32 %v355, %v956
        %v958 = vpop.f32.mrf.mxu0
        %v959 = vadd.f32 %v359, %v958
        %v960 = vpop.f32.mrf.mxu0
        %v961 = vadd.f32 %v355, %v960
        %v962 = vpop.f32.mrf.mxu0
        %v963 = vadd.f32 %v359, %v962
        %964 = vdwg.mxu0
        %v965 = vmax.f32 %v548, 0.0
        %v966 = vmax.f32 %v550, 0.0
        %v967 = vmax.f32 %v661, 0.0
        %v968 = vmax.f32 %v663, 0.0
        %v969 = vmax.f32 %v774, 0.0
        %v970 = vmax.f32 %v776, 0.0
        %v971 = vmax.f32 %v887, 0.0
        %v972 = vmax.f32 %v889, 0.0
        %v973 = vmax.f32 %v552, 0.0
        %v974 = vmax.f32 %v554, 0.0
        %v975 = vmax.f32 %v665, 0.0
        %v976 = vmax.f32 %v667, 0.0
        %v977 = vmax.f32 %v778, 0.0
        %v978 = vmax.f32 %v780, 0.0
        %v979 = vmax.f32 %v891, 0.0
        %v980 = vmax.f32 %v893, 0.0
        %v981 = vmax.f32 %v558, 0.0
        %v982 = vmax.f32 %v560, 0.0
        %v983 = vmax.f32 %v671, 0.0
        %v984 = vmax.f32 %v673, 0.0
        %v985 = vmax.f32 %v784, 0.0
        %v986 = vmax.f32 %v786, 0.0
        %v987 = vmax.f32 %v897, 0.0
        %v988 = vmax.f32 %v899, 0.0
        %v989 = vmax.f32 %v562, 0.0
        %v990 = vmax.f32 %v564, 0.0
        %v991 = vmax.f32 %v675, 0.0
        %v992 = vmax.f32 %v677, 0.0
        %v993 = vmax.f32 %v788, 0.0
        %v994 = vmax.f32 %v790, 0.0
        %v995 = vmax.f32 %v901, 0.0
        %v996 = vmax.f32 %v903, 0.0
        %v997 = vmax.f32 %v568, 0.0
        %v998 = vmax.f32 %v570, 0.0
        %v999 = vmax.f32 %v681, 0.0
        %v1000 = vmax.f32 %v683, 0.0
        %v1001 = vmax.f32 %v794, 0.0
        %v1002 = vmax.f32 %v796, 0.0
        %v1003 = vmax.f32 %v907, 0.0
        %v1004 = vmax.f32 %v909, 0.0
        %v1005 = vmax.f32 %v572, 0.0
        %v1006 = vmax.f32 %v574, 0.0
        %v1007 = vmax.f32 %v685, 0.0
        %v1008 = vmax.f32 %v687, 0.0
        %v1009 = vmax.f32 %v798, 0.0
        %v1010 = vmax.f32 %v800, 0.0
        %v1011 = vmax.f32 %v911, 0.0
        %v1012 = vmax.f32 %v913, 0.0
        %v1013 = vmax.f32 %v578, 0.0
        %v1014 = vmax.f32 %v580, 0.0
        %v1015 = vmax.f32 %v691, 0.0
        %v1016 = vmax.f32 %v693, 0.0
        %v1017 = vmax.f32 %v804, 0.0
        %v1018 = vmax.f32 %v806, 0.0
        %v1019 = vmax.f32 %v917, 0.0
        %v1020 = vmax.f32 %v919, 0.0
        %v1021 = vmax.f32 %v582, 0.0
        %v1022 = vmax.f32 %v584, 0.0
        %v1023 = vmax.f32 %v695, 0.0
        %v1024 = vmax.f32 %v697, 0.0
        %v1025 = vmax.f32 %v808, 0.0
        %v1026 = vmax.f32 %v810, 0.0
        %v1027 = vmax.f32 %v921, 0.0
        %v1028 = vmax.f32 %v923, 0.0
        %v1029 = vmax.f32 %v588, 0.0
        %v1030 = vmax.f32 %v590, 0.0
        %v1031 = vmax.f32 %v701, 0.0
        %v1032 = vmax.f32 %v703, 0.0
        %v1033 = vmax.f32 %v814, 0.0
        %v1034 = vmax.f32 %v816, 0.0
        %v1035 = vmax.f32 %v927, 0.0
        %v1036 = vmax.f32 %v929, 0.0
        %v1037 = vmax.f32 %v592, 0.0
        %v1038 = vmax.f32 %v594, 0.0
        %v1039 = vmax.f32 %v705, 0.0
        %v1040 = vmax.f32 %v707, 0.0
        %v1041 = vmax.f32 %v818, 0.0
        %v1042 = vmax.f32 %v820, 0.0
        %v1043 = vmax.f32 %v931, 0.0
        %v1044 = vmax.f32 %v933, 0.0
        %v1045 = vmax.f32 %v598, 0.0
        %v1046 = vmax.f32 %v600, 0.0
        %v1047 = vmax.f32 %v711, 0.0
        %v1048 = vmax.f32 %v713, 0.0
        %v1049 = vmax.f32 %v824, 0.0
        %v1050 = vmax.f32 %v826, 0.0
        %v1051 = vmax.f32 %v937, 0.0
        %v1052 = vmax.f32 %v939, 0.0
        %v1053 = vmax.f32 %v602, 0.0
        %v1054 = vmax.f32 %v604, 0.0
        %v1055 = vmax.f32 %v715, 0.0
        %v1056 = vmax.f32 %v717, 0.0
        %v1057 = vmax.f32 %v828, 0.0
        %v1058 = vmax.f32 %v830, 0.0
        %v1059 = vmax.f32 %v941, 0.0
        %v1060 = vmax.f32 %v943, 0.0
        %v1061 = vmax.f32 %v608, 0.0
        %v1062 = vmax.f32 %v610, 0.0
        %v1063 = vmax.f32 %v721, 0.0
        %v1064 = vmax.f32 %v723, 0.0
        %v1065 = vmax.f32 %v834, 0.0
        %v1066 = vmax.f32 %v836, 0.0
        %v1067 = vmax.f32 %v947, 0.0
        %v1068 = vmax.f32 %v949, 0.0
        %v1069 = vmax.f32 %v612, 0.0
        %v1070 = vmax.f32 %v614, 0.0
        %v1071 = vmax.f32 %v725, 0.0
        %v1072 = vmax.f32 %v727, 0.0
        %v1073 = vmax.f32 %v838, 0.0
        %v1074 = vmax.f32 %v840, 0.0
        %v1075 = vmax.f32 %v951, 0.0
        %v1076 = vmax.f32 %v953, 0.0
        %v1077 = vmax.f32 %v618, 0.0
        %v1078 = vmax.f32 %v620, 0.0
        %v1079 = vmax.f32 %v731, 0.0
        %v1080 = vmax.f32 %v733, 0.0
        %v1081 = vmax.f32 %v844, 0.0
        %v1082 = vmax.f32 %v846, 0.0
        %v1083 = vmax.f32 %v957, 0.0
        %v1084 = vmax.f32 %v959, 0.0
        %v1085 = vmax.f32 %v622, 0.0
        %v1086 = vmax.f32 %v624, 0.0
        %v1087 = vmax.f32 %v735, 0.0
        %v1088 = vmax.f32 %v737, 0.0
        %v1089 = vmax.f32 %v848, 0.0
        %v1090 = vmax.f32 %v850, 0.0
        %v1091 = vmax.f32 %v961, 0.0
        %v1092 = vmax.f32 %v963, 0.0
        %v1093 = vadd.f32 %v965, %v973
        %v1094 = vadd.f32 %v1093, %v981
        %v1095 = vadd.f32 %v1094, %v989
        %v1096 = vadd.f32 %v1095, %v997
        %v1097 = vadd.f32 %v1096, %v1005
        %v1098 = vadd.f32 %v1097, %v1013
        %v1099 = vadd.f32 %v1098, %v1021
        %v1100 = vadd.f32 %v1099, %v1029
        %v1101 = vadd.f32 %v1100, %v1037
        %v1102 = vadd.f32 %v1101, %v1045
        %v1103 = vadd.f32 %v1102, %v1053
        %v1104 = vadd.f32 %v1103, %v1061
        %v1105 = vadd.f32 %v1104, %v1069
        %v1106 = vadd.f32 %v1105, %v1077
        %v1107 = vadd.f32 %v1106, %v1085
        %v1108 = vrot.slane %v1107, 4
        %v1109 = vadd.f32 %v1107, %v1108
        %v1110 = vrot.slane %v1109, 2
        %v1111 = vadd.f32 %v1109, %v1110
        %v1112 = vrot.slane %v1111, 1
        %v1113 = vadd.f32 %v1111, %v1112
        %v1114 = vadd.f32 %v966, %v974
        %v1115 = vadd.f32 %v1114, %v982
        %v1116 = vadd.f32 %v1115, %v990
        %v1117 = vadd.f32 %v1116, %v998
        %v1118 = vadd.f32 %v1117, %v1006
        %v1119 = vadd.f32 %v1118, %v1014
        %v1120 = vadd.f32 %v1119, %v1022
        %v1121 = vadd.f32 %v1120, %v1030
        %v1122 = vadd.f32 %v1121, %v1038
        %v1123 = vadd.f32 %v1122, %v1046
        %v1124 = vadd.f32 %v1123, %v1054
        %v1125 = vadd.f32 %v1124, %v1062
        %v1126 = vadd.f32 %v1125, %v1070
        %v1127 = vadd.f32 %v1126, %v1078
        %v1128 = vadd.f32 %v1127, %v1086
        %v1129 = vrot.slane %v1128, 4
        %v1130 = vadd.f32 %v1128, %v1129
        %v1131 = vrot.slane %v1130, 2
        %v1132 = vadd.f32 %v1130, %v1131
        %v1133 = vrot.slane %v1132, 1
        %v1134 = vadd.f32 %v1132, %v1133
        %v1135 = vadd.f32 %v967, %v975
        %v1136 = vadd.f32 %v1135, %v983
        %v1137 = vadd.f32 %v1136, %v991
        %v1138 = vadd.f32 %v1137, %v999
        %v1139 = vadd.f32 %v1138, %v1007
        %v1140 = vadd.f32 %v1139, %v1015
        %v1141 = vadd.f32 %v1140, %v1023
        %v1142 = vadd.f32 %v1141, %v1031
        %v1143 = vadd.f32 %v1142, %v1039
        %v1144 = vadd.f32 %v1143, %v1047
        %v1145 = vadd.f32 %v1144, %v1055
        %v1146 = vadd.f32 %v1145, %v1063
        %v1147 = vadd.f32 %v1146, %v1071
        %v1148 = vadd.f32 %v1147, %v1079
        %v1149 = vadd.f32 %v1148, %v1087
        %v1150 = vrot.slane %v1149, 4
        %v1151 = vadd.f32 %v1149, %v1150
        %v1152 = vrot.slane %v1151, 2
        %v1153 = vadd.f32 %v1151, %v1152
        %v1154 = vrot.slane %v1153, 1
        %v1155 = vadd.f32 %v1153, %v1154
        %v1156 = vadd.f32 %v968, %v976
        %v1157 = vadd.f32 %v1156, %v984
        %v1158 = vadd.f32 %v1157, %v992
        %v1159 = vadd.f32 %v1158, %v1000
        %v1160 = vadd.f32 %v1159, %v1008
        %v1161 = vadd.f32 %v1160, %v1016
        %v1162 = vadd.f32 %v1161, %v1024
        %v1163 = vadd.f32 %v1162, %v1032
        %v1164 = vadd.f32 %v1163, %v1040
        %v1165 = vadd.f32 %v1164, %v1048
        %v1166 = vadd.f32 %v1165, %v1056
        %v1167 = vadd.f32 %v1166, %v1064
        %v1168 = vadd.f32 %v1167, %v1072
        %v1169 = vadd.f32 %v1168, %v1080
        %v1170 = vadd.f32 %v1169, %v1088
        %v1171 = vrot.slane %v1170, 4
        %v1172 = vadd.f32 %v1170, %v1171
        %v1173 = vrot.slane %v1172, 2
        %v1174 = vadd.f32 %v1172, %v1173
        %v1175 = vrot.slane %v1174, 1
        %v1176 = vadd.f32 %v1174, %v1175
        %v1177 = vadd.f32 %v969, %v977
        %v1178 = vadd.f32 %v1177, %v985
        %v1179 = vadd.f32 %v1178, %v993
        %v1180 = vadd.f32 %v1179, %v1001
        %v1181 = vadd.f32 %v1180, %v1009
        %v1182 = vadd.f32 %v1181, %v1017
        %v1183 = vadd.f32 %v1182, %v1025
        %v1184 = vadd.f32 %v1183, %v1033
        %v1185 = vadd.f32 %v1184, %v1041
        %v1186 = vadd.f32 %v1185, %v1049
        %v1187 = vadd.f32 %v1186, %v1057
        %v1188 = vadd.f32 %v1187, %v1065
        %v1189 = vadd.f32 %v1188, %v1073
        %v1190 = vadd.f32 %v1189, %v1081
        %v1191 = vadd.f32 %v1190, %v1089
        %v1192 = vrot.slane %v1191, 4
        %v1193 = vadd.f32 %v1191, %v1192
        %v1194 = vrot.slane %v1193, 2
        %v1195 = vadd.f32 %v1193, %v1194
        %v1196 = vrot.slane %v1195, 1
        %v1197 = vadd.f32 %v1195, %v1196
        %v1198 = vadd.f32 %v970, %v978
        %v1199 = vadd.f32 %v1198, %v986
        %v1200 = vadd.f32 %v1199, %v994
        %v1201 = vadd.f32 %v1200, %v1002
        %v1202 = vadd.f32 %v1201, %v1010
        %v1203 = vadd.f32 %v1202, %v1018
        %v1204 = vadd.f32 %v1203, %v1026
        %v1205 = vadd.f32 %v1204, %v1034
        %v1206 = vadd.f32 %v1205, %v1042
        %v1207 = vadd.f32 %v1206, %v1050
        %v1208 = vadd.f32 %v1207, %v1058
        %v1209 = vadd.f32 %v1208, %v1066
        %v1210 = vadd.f32 %v1209, %v1074
        %v1211 = vadd.f32 %v1210, %v1082
        %v1212 = vadd.f32 %v1211, %v1090
        %v1213 = vrot.slane %v1212, 4
        %v1214 = vadd.f32 %v1212, %v1213
        %v1215 = vrot.slane %v1214, 2
        %v1216 = vadd.f32 %v1214, %v1215
        %v1217 = vrot.slane %v1216, 1
        %v1218 = vadd.f32 %v1216, %v1217
        %v1219 = vadd.f32 %v971, %v979
        %v1220 = vadd.f32 %v1219, %v987
        %v1221 = vadd.f32 %v1220, %v995
        %v1222 = vadd.f32 %v1221, %v1003
        %v1223 = vadd.f32 %v1222, %v1011
        %v1224 = vadd.f32 %v1223, %v1019
        %v1225 = vadd.f32 %v1224, %v1027
        %v1226 = vadd.f32 %v1225, %v1035
        %v1227 = vadd.f32 %v1226, %v1043
        %v1228 = vadd.f32 %v1227, %v1051
        %v1229 = vadd.f32 %v1228, %v1059
        %v1230 = vadd.f32 %v1229, %v1067
        %v1231 = vadd.f32 %v1230, %v1075
        %v1232 = vadd.f32 %v1231, %v1083
        %v1233 = vadd.f32 %v1232, %v1091
        %v1234 = vrot.slane %v1233, 4
        %v1235 = vadd.f32 %v1233, %v1234
        %v1236 = vrot.slane %v1235, 2
        %v1237 = vadd.f32 %v1235, %v1236
        %v1238 = vrot.slane %v1237, 1
        %v1239 = vadd.f32 %v1237, %v1238
        %v1240 = vadd.f32 %v972, %v980
        %v1241 = vadd.f32 %v1240, %v988
        %v1242 = vadd.f32 %v1241, %v996
        %v1243 = vadd.f32 %v1242, %v1004
        %v1244 = vadd.f32 %v1243, %v1012
        %v1245 = vadd.f32 %v1244, %v1020
        %v1246 = vadd.f32 %v1245, %v1028
        %v1247 = vadd.f32 %v1246, %v1036
        %v1248 = vadd.f32 %v1247, %v1044
        %v1249 = vadd.f32 %v1248, %v1052
        %v1250 = vadd.f32 %v1249, %v1060
        %v1251 = vadd.f32 %v1250, %v1068
        %v1252 = vadd.f32 %v1251, %v1076
        %v1253 = vadd.f32 %v1252, %v1084
        %v1254 = vadd.f32 %v1253, %v1092
        %v1255 = vrot.slane %v1254, 4
        %v1256 = vadd.f32 %v1254, %v1255
        %v1257 = vrot.slane %v1256, 2
        %v1258 = vadd.f32 %v1256, %v1257
        %v1259 = vrot.slane %v1258, 1
        %v1260 = vadd.f32 %v1258, %v1259
        %v1261 = vadd.f32 %v1113, 0.0
        %v1262 = vadd.f32 %v1134, 0.0
        %v1263 = vadd.f32 %v1155, 0.0
        %v1264 = vadd.f32 %v1176, 0.0
        %v1265 = vadd.f32 %v1197, 0.0
        %v1266 = vadd.f32 %v1218, 0.0
        %v1267 = vadd.f32 %v1239, 0.0
        %v1268 = vadd.f32 %v1260, 0.0
        %s1269 = scalar_lea.vmem %s282, 64
        %v1270 = vld [vmem:[%s1269] sm:$0xf]
        %v1271 = vld [vmem:[%s1269 + $0x4] sm:$0xf]
        %v1272 = vld [vmem:[%s1269 + $0x8] sm:$0xf]
        %v1273 = vld [vmem:[%s1269 + $0xc] sm:$0xf]
        %v1274 = vld [vmem:[%s1269 + $0x10] sm:$0xf]
        %v1275 = vld [vmem:[%s1269 + $0x14] sm:$0xf]
        %v1276 = vld [vmem:[%s1269 + $0x18] sm:$0xf]
        %v1277 = vld [vmem:[%s1269 + $0x1c] sm:$0xf]
        %v1278 = vld [vmem:[%s1269 + $0x20] sm:$0xf]
        %v1279 = vld [vmem:[%s1269 + $0x24] sm:$0xf]
        %v1280 = vld [vmem:[%s1269 + $0x28] sm:$0xf]
        %v1281 = vld [vmem:[%s1269 + $0x2c] sm:$0xf]
        %v1282 = vld [vmem:[%s1269 + $0x30] sm:$0xf]
        %v1283 = vld [vmem:[%s1269 + $0x34] sm:$0xf]
        %v1284 = vld [vmem:[%s1269 + $0x38] sm:$0xf]
        %v1285 = vld [vmem:[%s1269 + $0x3c] sm:$0xf]
        %v1302 = vunpack.c.l.b16 %v1270
        %v1303 = vunpack.c.l.b16 %v1271
        %v1304 = vunpack.c.l.b16 %v1272
        %v1305 = vunpack.c.l.b16 %v1273
        %v1306 = vunpack.c.l.b16 %v1274
        %v1307 = vunpack.c.l.b16 %v1275
        %v1308 = vunpack.c.l.b16 %v1276
        %v1309 = vunpack.c.l.b16 %v1277
        %v1310 = vunpack.c.l.b16 %v1278
        %v1311 = vunpack.c.l.b16 %v1279
        %v1312 = vunpack.c.l.b16 %v1280
        %v1313 = vunpack.c.l.b16 %v1281
        %v1314 = vunpack.c.l.b16 %v1282
        %v1315 = vunpack.c.l.b16 %v1283
        %v1316 = vunpack.c.l.b16 %v1284
        %v1317 = vunpack.c.l.b16 %v1285
        %v1318 = vpack.c.b16 %v1303, %v1302
        %v1319 = vpack.c.b16 %v1305, %v1304
        %v1320 = vpack.c.b16 %v1307, %v1306
        %v1321 = vpack.c.b16 %v1309, %v1308
        %v1322 = vpack.c.b16 %v1311, %v1310
        %v1323 = vpack.c.b16 %v1313, %v1312
        %v1324 = vpack.c.b16 %v1315, %v1314
        %v1325 = vpack.c.b16 %v1317, %v1316
        %v1327 = vsel %vm488, %v1318, 0
        %v1330 = vsel %vm488, %v1319, 0
        %v1333 = vsel %vm488, %v1320, 0
        %v1336 = vsel %vm488, %v1321, 0
        %v1339 = vsel %vm488, %v1322, 0
        %v1342 = vsel %vm488, %v1323, 0
        %v1345 = vsel %vm488, %v1324, 0
        %v1348 = vsel %vm488, %v1325, 0
        %1350 = vmatprep.subr.bf16.mxu0 0
        %1351 = vmatpush1.bf16.msra.mxu0 0
        %1352 = vmatprep.subr.bf16.mxu0 0
        %1353 = vmatpush1.bf16.msra.mxu0 0
        %1354 = vmatprep.subr.bf16.mxu0 0
        %1355 = vmatpush1.bf16.msra.mxu0 0
        %1356 = vmatprep.subr.bf16.mxu0 0
        %1357 = vmatpush1.bf16.msra.mxu0 0
        %1358 = vmatprep.subr.bf16.mxu0 0
        %1359 = vmatpush1.bf16.msra.mxu0 0
        %1360 = vmatprep.subr.bf16.mxu0 0
        %1361 = vmatpush1.bf16.msra.mxu0 0
        %1362 = vmatprep.subr.bf16.mxu0 %v465
        %1363 = vmatpush1.bf16.msra.mxu0 %v464
        %1364 = vmatprep.subr.bf16.mxu0 %v457
        %1365 = vmatpush1.bf16.msra.mxu0 %v456
        %1366 = vmatprep.subr.bf16.mxu0 0
        %1367 = vmatpush2.bf16.msra.mxu0 0
        %1368 = vmatprep.subr.bf16.mxu0 0
        %1369 = vmatpush2.bf16.msra.mxu0 0
        %1370 = vmatprep.subr.bf16.mxu0 0
        %1371 = vmatpush2.bf16.msra.mxu0 0
        %1372 = vmatprep.subr.bf16.mxu0 0
        %1373 = vmatpush2.bf16.msra.mxu0 0
        %1374 = vmatprep.subr.bf16.mxu0 0
        %1375 = vmatpush2.bf16.msra.mxu0 0
        %1376 = vmatprep.subr.bf16.mxu0 0
        %1377 = vmatpush2.bf16.msra.mxu0 0
        %1378 = vmatprep.subr.bf16.mxu0 0
        %1379 = vmatpush2.bf16.msra.mxu0 0
        %1380 = vmatprep.subr.bf16.mxu0 0
        %1381 = vmatpush2.bf16.msra.mxu0 0
        %1382 = vmatprep.mubr.bf16.mxu0 0
        %1383 = vmatmul.mubr.bf16.gmra.mxu0 %v1327
        %v1384 = vpop.f32.mrf.mxu0
        %v1385 = vadd.f32 %v331, %v1384
        %v1386 = vpop.f32.mrf.mxu0
        %v1387 = vadd.f32 %v335, %v1386
        %v1388 = vpop.f32.mrf.mxu0
        %v1389 = vadd.f32 %v331, %v1388
        %v1390 = vpop.f32.mrf.mxu0
        %v1391 = vadd.f32 %v335, %v1390
        %1392 = vmatprep.mubr.bf16.mxu0 0
        %1393 = vmatmul.mubr.bf16.gmra.mxu0 %v1330
        %v1394 = vpop.f32.mrf.mxu0
        %v1395 = vadd.f32 %v331, %v1394
        %v1396 = vpop.f32.mrf.mxu0
        %v1397 = vadd.f32 %v335, %v1396
        %v1398 = vpop.f32.mrf.mxu0
        %v1399 = vadd.f32 %v331, %v1398
        %v1400 = vpop.f32.mrf.mxu0
        %v1401 = vadd.f32 %v335, %v1400
        %1402 = vmatprep.mubr.bf16.mxu0 0
        %1403 = vmatmul.mubr.bf16.gmra.mxu0 %v1333
        %v1404 = vpop.f32.mrf.mxu0
        %v1405 = vadd.f32 %v331, %v1404
        %v1406 = vpop.f32.mrf.mxu0
        %v1407 = vadd.f32 %v335, %v1406
        %v1408 = vpop.f32.mrf.mxu0
        %v1409 = vadd.f32 %v331, %v1408
        %v1410 = vpop.f32.mrf.mxu0
        %v1411 = vadd.f32 %v335, %v1410
        %1412 = vmatprep.mubr.bf16.mxu0 0
        %1413 = vmatmul.mubr.bf16.gmra.mxu0 %v1336
        %v1414 = vpop.f32.mrf.mxu0
        %v1415 = vadd.f32 %v331, %v1414
        %v1416 = vpop.f32.mrf.mxu0
        %v1417 = vadd.f32 %v335, %v1416
        %v1418 = vpop.f32.mrf.mxu0
        %v1419 = vadd.f32 %v331, %v1418
        %v1420 = vpop.f32.mrf.mxu0
        %v1421 = vadd.f32 %v335, %v1420
        %1422 = vmatprep.mubr.bf16.mxu0 0
        %1423 = vmatmul.mubr.bf16.gmra.mxu0 %v1339
        %v1424 = vpop.f32.mrf.mxu0
        %v1425 = vadd.f32 %v331, %v1424
        %v1426 = vpop.f32.mrf.mxu0
        %v1427 = vadd.f32 %v335, %v1426
        %v1428 = vpop.f32.mrf.mxu0
        %v1429 = vadd.f32 %v331, %v1428
        %v1430 = vpop.f32.mrf.mxu0
        %v1431 = vadd.f32 %v335, %v1430
        %1432 = vmatprep.mubr.bf16.mxu0 0
        %1433 = vmatmul.mubr.bf16.gmra.mxu0 %v1342
        %v1434 = vpop.f32.mrf.mxu0
        %v1435 = vadd.f32 %v331, %v1434
        %v1436 = vpop.f32.mrf.mxu0
        %v1437 = vadd.f32 %v335, %v1436
        %v1438 = vpop.f32.mrf.mxu0
        %v1439 = vadd.f32 %v331, %v1438
        %v1440 = vpop.f32.mrf.mxu0
        %v1441 = vadd.f32 %v335, %v1440
        %1442 = vmatprep.mubr.bf16.mxu0 0
        %1443 = vmatmul.mubr.bf16.gmra.mxu0 %v1345
        %v1444 = vpop.f32.mrf.mxu0
        %v1445 = vadd.f32 %v331, %v1444
        %v1446 = vpop.f32.mrf.mxu0
        %v1447 = vadd.f32 %v335, %v1446
        %v1448 = vpop.f32.mrf.mxu0
        %v1449 = vadd.f32 %v331, %v1448
        %v1450 = vpop.f32.mrf.mxu0
        %v1451 = vadd.f32 %v335, %v1450
        %1452 = vmatprep.mubr.bf16.mxu0 0
        %1453 = vmatmul.mubr.bf16.gmra.mxu0 %v1348
        %v1454 = vpop.f32.mrf.mxu0
        %v1455 = vadd.f32 %v331, %v1454
        %v1456 = vpop.f32.mrf.mxu0
        %v1457 = vadd.f32 %v335, %v1456
        %v1458 = vpop.f32.mrf.mxu0
        %v1459 = vadd.f32 %v331, %v1458
        %v1460 = vpop.f32.mrf.mxu0
        %v1461 = vadd.f32 %v335, %v1460
        %1462 = vdwg.mxu0
        %1463 = vmatprep.subr.bf16.mxu0 0
        %1464 = vmatpush1.bf16.msra.mxu0 0
        %1465 = vmatprep.subr.bf16.mxu0 0
        %1466 = vmatpush1.bf16.msra.mxu0 0
        %1467 = vmatprep.subr.bf16.mxu0 0
        %1468 = vmatpush1.bf16.msra.mxu0 0
        %1469 = vmatprep.subr.bf16.mxu0 0
        %1470 = vmatpush1.bf16.msra.mxu0 0
        %1471 = vmatprep.subr.bf16.mxu0 0
        %1472 = vmatpush1.bf16.msra.mxu0 0
        %1473 = vmatprep.subr.bf16.mxu0 0
        %1474 = vmatpush1.bf16.msra.mxu0 0
        %1475 = vmatprep.subr.bf16.mxu0 %v467
        %1476 = vmatpush1.bf16.msra.mxu0 %v466
        %1477 = vmatprep.subr.bf16.mxu0 %v459
        %1478 = vmatpush1.bf16.msra.mxu0 %v458
        %1479 = vmatprep.subr.bf16.mxu0 0
        %1480 = vmatpush2.bf16.msra.mxu0 0
        %1481 = vmatprep.subr.bf16.mxu0 0
        %1482 = vmatpush2.bf16.msra.mxu0 0
        %1483 = vmatprep.subr.bf16.mxu0 0
        %1484 = vmatpush2.bf16.msra.mxu0 0
        %1485 = vmatprep.subr.bf16.mxu0 0
        %1486 = vmatpush2.bf16.msra.mxu0 0
        %1487 = vmatprep.subr.bf16.mxu0 0
        %1488 = vmatpush2.bf16.msra.mxu0 0
        %1489 = vmatprep.subr.bf16.mxu0 0
        %1490 = vmatpush2.bf16.msra.mxu0 0
        %1491 = vmatprep.subr.bf16.mxu0 0
        %1492 = vmatpush2.bf16.msra.mxu0 0
        %1493 = vmatprep.subr.bf16.mxu0 0
        %1494 = vmatpush2.bf16.msra.mxu0 0
        %1495 = vmatprep.mubr.bf16.mxu0 0
        %1496 = vmatmul.mubr.bf16.gmra.mxu0 %v1327
        %v1497 = vpop.f32.mrf.mxu0
        %v1498 = vadd.f32 %v339, %v1497
        %v1499 = vpop.f32.mrf.mxu0
        %v1500 = vadd.f32 %v343, %v1499
        %v1501 = vpop.f32.mrf.mxu0
        %v1502 = vadd.f32 %v339, %v1501
        %v1503 = vpop.f32.mrf.mxu0
        %v1504 = vadd.f32 %v343, %v1503
        %1505 = vmatprep.mubr.bf16.mxu0 0
        %1506 = vmatmul.mubr.bf16.gmra.mxu0 %v1330
        %v1507 = vpop.f32.mrf.mxu0
        %v1508 = vadd.f32 %v339, %v1507
        %v1509 = vpop.f32.mrf.mxu0
        %v1510 = vadd.f32 %v343, %v1509
        %v1511 = vpop.f32.mrf.mxu0
        %v1512 = vadd.f32 %v339, %v1511
        %v1513 = vpop.f32.mrf.mxu0
        %v1514 = vadd.f32 %v343, %v1513
        %1515 = vmatprep.mubr.bf16.mxu0 0
        %1516 = vmatmul.mubr.bf16.gmra.mxu0 %v1333
        %v1517 = vpop.f32.mrf.mxu0
        %v1518 = vadd.f32 %v339, %v1517
        %v1519 = vpop.f32.mrf.mxu0
        %v1520 = vadd.f32 %v343, %v1519
        %v1521 = vpop.f32.mrf.mxu0
        %v1522 = vadd.f32 %v339, %v1521
        %v1523 = vpop.f32.mrf.mxu0
        %v1524 = vadd.f32 %v343, %v1523
        %1525 = vmatprep.mubr.bf16.mxu0 0
        %1526 = vmatmul.mubr.bf16.gmra.mxu0 %v1336
        %v1527 = vpop.f32.mrf.mxu0
        %v1528 = vadd.f32 %v339, %v1527
        %v1529 = vpop.f32.mrf.mxu0
        %v1530 = vadd.f32 %v343, %v1529
        %v1531 = vpop.f32.mrf.mxu0
        %v1532 = vadd.f32 %v339, %v1531
        %v1533 = vpop.f32.mrf.mxu0
        %v1534 = vadd.f32 %v343, %v1533
        %1535 = vmatprep.mubr.bf16.mxu0 0
        %1536 = vmatmul.mubr.bf16.gmra.mxu0 %v1339
        %v1537 = vpop.f32.mrf.mxu0
        %v1538 = vadd.f32 %v339, %v1537
        %v1539 = vpop.f32.mrf.mxu0
        %v1540 = vadd.f32 %v343, %v1539
        %v1541 = vpop.f32.mrf.mxu0
        %v1542 = vadd.f32 %v339, %v1541
        %v1543 = vpop.f32.mrf.mxu0
        %v1544 = vadd.f32 %v343, %v1543
        %1545 = vmatprep.mubr.bf16.mxu0 0
        %1546 = vmatmul.mubr.bf16.gmra.mxu0 %v1342
        %v1547 = vpop.f32.mrf.mxu0
        %v1548 = vadd.f32 %v339, %v1547
        %v1549 = vpop.f32.mrf.mxu0
        %v1550 = vadd.f32 %v343, %v1549
        %v1551 = vpop.f32.mrf.mxu0
        %v1552 = vadd.f32 %v339, %v1551
        %v1553 = vpop.f32.mrf.mxu0
        %v1554 = vadd.f32 %v343, %v1553
        %1555 = vmatprep.mubr.bf16.mxu0 0
        %1556 = vmatmul.mubr.bf16.gmra.mxu0 %v1345
        %v1557 = vpop.f32.mrf.mxu0
        %v1558 = vadd.f32 %v339, %v1557
        %v1559 = vpop.f32.mrf.mxu0
        %v1560 = vadd.f32 %v343, %v1559
        %v1561 = vpop.f32.mrf.mxu0
        %v1562 = vadd.f32 %v339, %v1561
        %v1563 = vpop.f32.mrf.mxu0
        %v1564 = vadd.f32 %v343, %v1563
        %1565 = vmatprep.mubr.bf16.mxu0 0
        %1566 = vmatmul.mubr.bf16.gmra.mxu0 %v1348
        %v1567 = vpop.f32.mrf.mxu0
        %v1568 = vadd.f32 %v339, %v1567
        %v1569 = vpop.f32.mrf.mxu0
        %v1570 = vadd.f32 %v343, %v1569
        %v1571 = vpop.f32.mrf.mxu0
        %v1572 = vadd.f32 %v339, %v1571
        %v1573 = vpop.f32.mrf.mxu0
        %v1574 = vadd.f32 %v343, %v1573
        %1575 = vdwg.mxu0
        %1576 = vmatprep.subr.bf16.mxu0 0
        %1577 = vmatpush1.bf16.msra.mxu0 0
        %1578 = vmatprep.subr.bf16.mxu0 0
        %1579 = vmatpush1.bf16.msra.mxu0 0
        %1580 = vmatprep.subr.bf16.mxu0 0
        %1581 = vmatpush1.bf16.msra.mxu0 0
        %1582 = vmatprep.subr.bf16.mxu0 0
        %1583 = vmatpush1.bf16.msra.mxu0 0
        %1584 = vmatprep.subr.bf16.mxu0 0
        %1585 = vmatpush1.bf16.msra.mxu0 0
        %1586 = vmatprep.subr.bf16.mxu0 0
        %1587 = vmatpush1.bf16.msra.mxu0 0
        %1588 = vmatprep.subr.bf16.mxu0 %v469
        %1589 = vmatpush1.bf16.msra.mxu0 %v468
        %1590 = vmatprep.subr.bf16.mxu0 %v461
        %1591 = vmatpush1.bf16.msra.mxu0 %v460
        %1592 = vmatprep.subr.bf16.mxu0 0
        %1593 = vmatpush2.bf16.msra.mxu0 0
        %1594 = vmatprep.subr.bf16.mxu0 0
        %1595 = vmatpush2.bf16.msra.mxu0 0
        %1596 = vmatprep.subr.bf16.mxu0 0
        %1597 = vmatpush2.bf16.msra.mxu0 0
        %1598 = vmatprep.subr.bf16.mxu0 0
        %1599 = vmatpush2.bf16.msra.mxu0 0
        %1600 = vmatprep.subr.bf16.mxu0 0
        %1601 = vmatpush2.bf16.msra.mxu0 0
        %1602 = vmatprep.subr.bf16.mxu0 0
        %1603 = vmatpush2.bf16.msra.mxu0 0
        %1604 = vmatprep.subr.bf16.mxu0 0
        %1605 = vmatpush2.bf16.msra.mxu0 0
        %1606 = vmatprep.subr.bf16.mxu0 0
        %1607 = vmatpush2.bf16.msra.mxu0 0
        %1608 = vmatprep.mubr.bf16.mxu0 0
        %1609 = vmatmul.mubr.bf16.gmra.mxu0 %v1327
        %v1610 = vpop.f32.mrf.mxu0
        %v1611 = vadd.f32 %v347, %v1610
        %v1612 = vpop.f32.mrf.mxu0
        %v1613 = vadd.f32 %v351, %v1612
        %v1614 = vpop.f32.mrf.mxu0
        %v1615 = vadd.f32 %v347, %v1614
        %v1616 = vpop.f32.mrf.mxu0
        %v1617 = vadd.f32 %v351, %v1616
        %1618 = vmatprep.mubr.bf16.mxu0 0
        %1619 = vmatmul.mubr.bf16.gmra.mxu0 %v1330
        %v1620 = vpop.f32.mrf.mxu0
        %v1621 = vadd.f32 %v347, %v1620
        %v1622 = vpop.f32.mrf.mxu0
        %v1623 = vadd.f32 %v351, %v1622
        %v1624 = vpop.f32.mrf.mxu0
        %v1625 = vadd.f32 %v347, %v1624
        %v1626 = vpop.f32.mrf.mxu0
        %v1627 = vadd.f32 %v351, %v1626
        %1628 = vmatprep.mubr.bf16.mxu0 0
        %1629 = vmatmul.mubr.bf16.gmra.mxu0 %v1333
        %v1630 = vpop.f32.mrf.mxu0
        %v1631 = vadd.f32 %v347, %v1630
        %v1632 = vpop.f32.mrf.mxu0
        %v1633 = vadd.f32 %v351, %v1632
        %v1634 = vpop.f32.mrf.mxu0
        %v1635 = vadd.f32 %v347, %v1634
        %v1636 = vpop.f32.mrf.mxu0
        %v1637 = vadd.f32 %v351, %v1636
        %1638 = vmatprep.mubr.bf16.mxu0 0
        %1639 = vmatmul.mubr.bf16.gmra.mxu0 %v1336
        %v1640 = vpop.f32.mrf.mxu0
        %v1641 = vadd.f32 %v347, %v1640
        %v1642 = vpop.f32.mrf.mxu0
        %v1643 = vadd.f32 %v351, %v1642
        %v1644 = vpop.f32.mrf.mxu0
        %v1645 = vadd.f32 %v347, %v1644
        %v1646 = vpop.f32.mrf.mxu0
        %v1647 = vadd.f32 %v351, %v1646
        %1648 = vmatprep.mubr.bf16.mxu0 0
        %1649 = vmatmul.mubr.bf16.gmra.mxu0 %v1339
        %v1650 = vpop.f32.mrf.mxu0
        %v1651 = vadd.f32 %v347, %v1650
        %v1652 = vpop.f32.mrf.mxu0
        %v1653 = vadd.f32 %v351, %v1652
        %v1654 = vpop.f32.mrf.mxu0
        %v1655 = vadd.f32 %v347, %v1654
        %v1656 = vpop.f32.mrf.mxu0
        %v1657 = vadd.f32 %v351, %v1656
        %1658 = vmatprep.mubr.bf16.mxu0 0
        %1659 = vmatmul.mubr.bf16.gmra.mxu0 %v1342
        %v1660 = vpop.f32.mrf.mxu0
        %v1661 = vadd.f32 %v347, %v1660
        %v1662 = vpop.f32.mrf.mxu0
        %v1663 = vadd.f32 %v351, %v1662
        %v1664 = vpop.f32.mrf.mxu0
        %v1665 = vadd.f32 %v347, %v1664
        %v1666 = vpop.f32.mrf.mxu0
        %v1667 = vadd.f32 %v351, %v1666
        %1668 = vmatprep.mubr.bf16.mxu0 0
        %1669 = vmatmul.mubr.bf16.gmra.mxu0 %v1345
        %v1670 = vpop.f32.mrf.mxu0
        %v1671 = vadd.f32 %v347, %v1670
        %v1672 = vpop.f32.mrf.mxu0
        %v1673 = vadd.f32 %v351, %v1672
        %v1674 = vpop.f32.mrf.mxu0
        %v1675 = vadd.f32 %v347, %v1674
        %v1676 = vpop.f32.mrf.mxu0
        %v1677 = vadd.f32 %v351, %v1676
        %1678 = vmatprep.mubr.bf16.mxu0 0
        %1679 = vmatmul.mubr.bf16.gmra.mxu0 %v1348
        %v1680 = vpop.f32.mrf.mxu0
        %v1681 = vadd.f32 %v347, %v1680
        %v1682 = vpop.f32.mrf.mxu0
        %v1683 = vadd.f32 %v351, %v1682
        %v1684 = vpop.f32.mrf.mxu0
        %v1685 = vadd.f32 %v347, %v1684
        %v1686 = vpop.f32.mrf.mxu0
        %v1687 = vadd.f32 %v351, %v1686
        %1688 = vdwg.mxu0
        %1689 = vmatprep.subr.bf16.mxu0 0
        %1690 = vmatpush1.bf16.msra.mxu0 0
        %1691 = vmatprep.subr.bf16.mxu0 0
        %1692 = vmatpush1.bf16.msra.mxu0 0
        %1693 = vmatprep.subr.bf16.mxu0 0
        %1694 = vmatpush1.bf16.msra.mxu0 0
        %1695 = vmatprep.subr.bf16.mxu0 0
        %1696 = vmatpush1.bf16.msra.mxu0 0
        %1697 = vmatprep.subr.bf16.mxu0 0
        %1698 = vmatpush1.bf16.msra.mxu0 0
        %1699 = vmatprep.subr.bf16.mxu0 0
        %1700 = vmatpush1.bf16.msra.mxu0 0
        %1701 = vmatprep.subr.bf16.mxu0 %v471
        %1702 = vmatpush1.bf16.msra.mxu0 %v470
        %1703 = vmatprep.subr.bf16.mxu0 %v463
        %1704 = vmatpush1.bf16.msra.mxu0 %v462
        %1705 = vmatprep.subr.bf16.mxu0 0
        %1706 = vmatpush2.bf16.msra.mxu0 0
        %1707 = vmatprep.subr.bf16.mxu0 0
        %1708 = vmatpush2.bf16.msra.mxu0 0
        %1709 = vmatprep.subr.bf16.mxu0 0
        %1710 = vmatpush2.bf16.msra.mxu0 0
        %1711 = vmatprep.subr.bf16.mxu0 0
        %1712 = vmatpush2.bf16.msra.mxu0 0
        %1713 = vmatprep.subr.bf16.mxu0 0
        %1714 = vmatpush2.bf16.msra.mxu0 0
        %1715 = vmatprep.subr.bf16.mxu0 0
        %1716 = vmatpush2.bf16.msra.mxu0 0
        %1717 = vmatprep.subr.bf16.mxu0 0
        %1718 = vmatpush2.bf16.msra.mxu0 0
        %1719 = vmatprep.subr.bf16.mxu0 0
        %1720 = vmatpush2.bf16.msra.mxu0 0
        %1721 = vmatprep.mubr.bf16.mxu0 0
        %1722 = vmatmul.mubr.bf16.gmra.mxu0 %v1327
        %v1723 = vpop.f32.mrf.mxu0
        %v1724 = vadd.f32 %v355, %v1723
        %v1725 = vpop.f32.mrf.mxu0
        %v1726 = vadd.f32 %v359, %v1725
        %v1727 = vpop.f32.mrf.mxu0
        %v1728 = vadd.f32 %v355, %v1727
        %v1729 = vpop.f32.mrf.mxu0
        %v1730 = vadd.f32 %v359, %v1729
        %1731 = vmatprep.mubr.bf16.mxu0 0
        %1732 = vmatmul.mubr.bf16.gmra.mxu0 %v1330
        %v1733 = vpop.f32.mrf.mxu0
        %v1734 = vadd.f32 %v355, %v1733
        %v1735 = vpop.f32.mrf.mxu0
        %v1736 = vadd.f32 %v359, %v1735
        %v1737 = vpop.f32.mrf.mxu0
        %v1738 = vadd.f32 %v355, %v1737
        %v1739 = vpop.f32.mrf.mxu0
        %v1740 = vadd.f32 %v359, %v1739
        %1741 = vmatprep.mubr.bf16.mxu0 0
        %1742 = vmatmul.mubr.bf16.gmra.mxu0 %v1333
        %v1743 = vpop.f32.mrf.mxu0
        %v1744 = vadd.f32 %v355, %v1743
        %v1745 = vpop.f32.mrf.mxu0
        %v1746 = vadd.f32 %v359, %v1745
        %v1747 = vpop.f32.mrf.mxu0
        %v1748 = vadd.f32 %v355, %v1747
        %v1749 = vpop.f32.mrf.mxu0
        %v1750 = vadd.f32 %v359, %v1749
        %1751 = vmatprep.mubr.bf16.mxu0 0
        %1752 = vmatmul.mubr.bf16.gmra.mxu0 %v1336
        %v1753 = vpop.f32.mrf.mxu0
        %v1754 = vadd.f32 %v355, %v1753
        %v1755 = vpop.f32.mrf.mxu0
        %v1756 = vadd.f32 %v359, %v1755
        %v1757 = vpop.f32.mrf.mxu0
        %v1758 = vadd.f32 %v355, %v1757
        %v1759 = vpop.f32.mrf.mxu0
        %v1760 = vadd.f32 %v359, %v1759
        %1761 = vmatprep.mubr.bf16.mxu0 0
        %1762 = vmatmul.mubr.bf16.gmra.mxu0 %v1339
        %v1763 = vpop.f32.mrf.mxu0
        %v1764 = vadd.f32 %v355, %v1763
        %v1765 = vpop.f32.mrf.mxu0
        %v1766 = vadd.f32 %v359, %v1765
        %v1767 = vpop.f32.mrf.mxu0
        %v1768 = vadd.f32 %v355, %v1767
        %v1769 = vpop.f32.mrf.mxu0
        %v1770 = vadd.f32 %v359, %v1769
        %1771 = vmatprep.mubr.bf16.mxu0 0
        %1772 = vmatmul.mubr.bf16.gmra.mxu0 %v1342
        %v1773 = vpop.f32.mrf.mxu0
        %v1774 = vadd.f32 %v355, %v1773
        %v1775 = vpop.f32.mrf.mxu0
        %v1776 = vadd.f32 %v359, %v1775
        %v1777 = vpop.f32.mrf.mxu0
        %v1778 = vadd.f32 %v355, %v1777
        %v1779 = vpop.f32.mrf.mxu0
        %v1780 = vadd.f32 %v359, %v1779
        %1781 = vmatprep.mubr.bf16.mxu0 0
        %1782 = vmatmul.mubr.bf16.gmra.mxu0 %v1345
        %v1783 = vpop.f32.mrf.mxu0
        %v1784 = vadd.f32 %v355, %v1783
        %v1785 = vpop.f32.mrf.mxu0
        %v1786 = vadd.f32 %v359, %v1785
        %v1787 = vpop.f32.mrf.mxu0
        %v1788 = vadd.f32 %v355, %v1787
        %v1789 = vpop.f32.mrf.mxu0
        %v1790 = vadd.f32 %v359, %v1789
        %1791 = vmatprep.mubr.bf16.mxu0 0
        %1792 = vmatmul.mubr.bf16.gmra.mxu0 %v1348
        %v1793 = vpop.f32.mrf.mxu0
        %v1794 = vadd.f32 %v355, %v1793
        %v1795 = vpop.f32.mrf.mxu0
        %v1796 = vadd.f32 %v359, %v1795
        %v1797 = vpop.f32.mrf.mxu0
        %v1798 = vadd.f32 %v355, %v1797
        %v1799 = vpop.f32.mrf.mxu0
        %v1800 = vadd.f32 %v359, %v1799
        %1801 = vdwg.mxu0
        %v1802 = vmax.f32 %v1385, 0.0
        %v1803 = vmax.f32 %v1387, 0.0
        %v1804 = vmax.f32 %v1498, 0.0
        %v1805 = vmax.f32 %v1500, 0.0
        %v1806 = vmax.f32 %v1611, 0.0
        %v1807 = vmax.f32 %v1613, 0.0
        %v1808 = vmax.f32 %v1724, 0.0
        %v1809 = vmax.f32 %v1726, 0.0
        %v1810 = vmax.f32 %v1389, 0.0
        %v1811 = vmax.f32 %v1391, 0.0
        %v1812 = vmax.f32 %v1502, 0.0
        %v1813 = vmax.f32 %v1504, 0.0
        %v1814 = vmax.f32 %v1615, 0.0
        %v1815 = vmax.f32 %v1617, 0.0
        %v1816 = vmax.f32 %v1728, 0.0
        %v1817 = vmax.f32 %v1730, 0.0
        %v1818 = vmax.f32 %v1395, 0.0
        %v1819 = vmax.f32 %v1397, 0.0
        %v1820 = vmax.f32 %v1508, 0.0
        %v1821 = vmax.f32 %v1510, 0.0
        %v1822 = vmax.f32 %v1621, 0.0
        %v1823 = vmax.f32 %v1623, 0.0
        %v1824 = vmax.f32 %v1734, 0.0
        %v1825 = vmax.f32 %v1736, 0.0
        %v1826 = vmax.f32 %v1399, 0.0
        %v1827 = vmax.f32 %v1401, 0.0
        %v1828 = vmax.f32 %v1512, 0.0
        %v1829 = vmax.f32 %v1514, 0.0
        %v1830 = vmax.f32 %v1625, 0.0
        %v1831 = vmax.f32 %v1627, 0.0
        %v1832 = vmax.f32 %v1738, 0.0
        %v1833 = vmax.f32 %v1740, 0.0
        %v1834 = vmax.f32 %v1405, 0.0
        %v1835 = vmax.f32 %v1407, 0.0
        %v1836 = vmax.f32 %v1518, 0.0
        %v1837 = vmax.f32 %v1520, 0.0
        %v1838 = vmax.f32 %v1631, 0.0
        %v1839 = vmax.f32 %v1633, 0.0
        %v1840 = vmax.f32 %v1744, 0.0
        %v1841 = vmax.f32 %v1746, 0.0
        %v1842 = vmax.f32 %v1409, 0.0
        %v1843 = vmax.f32 %v1411, 0.0
        %v1844 = vmax.f32 %v1522, 0.0
        %v1845 = vmax.f32 %v1524, 0.0
        %v1846 = vmax.f32 %v1635, 0.0
        %v1847 = vmax.f32 %v1637, 0.0
        %v1848 = vmax.f32 %v1748, 0.0
        %v1849 = vmax.f32 %v1750, 0.0
        %v1850 = vmax.f32 %v1415, 0.0
        %v1851 = vmax.f32 %v1417, 0.0
        %v1852 = vmax.f32 %v1528, 0.0
        %v1853 = vmax.f32 %v1530, 0.0
        %v1854 = vmax.f32 %v1641, 0.0
        %v1855 = vmax.f32 %v1643, 0.0
        %v1856 = vmax.f32 %v1754, 0.0
        %v1857 = vmax.f32 %v1756, 0.0
        %v1858 = vmax.f32 %v1419, 0.0
        %v1859 = vmax.f32 %v1421, 0.0
        %v1860 = vmax.f32 %v1532, 0.0
        %v1861 = vmax.f32 %v1534, 0.0
        %v1862 = vmax.f32 %v1645, 0.0
        %v1863 = vmax.f32 %v1647, 0.0
        %v1864 = vmax.f32 %v1758, 0.0
        %v1865 = vmax.f32 %v1760, 0.0
        %v1866 = vmax.f32 %v1425, 0.0
        %v1867 = vmax.f32 %v1427, 0.0
        %v1868 = vmax.f32 %v1538, 0.0
        %v1869 = vmax.f32 %v1540, 0.0
        %v1870 = vmax.f32 %v1651, 0.0
        %v1871 = vmax.f32 %v1653, 0.0
        %v1872 = vmax.f32 %v1764, 0.0
        %v1873 = vmax.f32 %v1766, 0.0
        %v1874 = vmax.f32 %v1429, 0.0
        %v1875 = vmax.f32 %v1431, 0.0
        %v1876 = vmax.f32 %v1542, 0.0
        %v1877 = vmax.f32 %v1544, 0.0
        %v1878 = vmax.f32 %v1655, 0.0
        %v1879 = vmax.f32 %v1657, 0.0
        %v1880 = vmax.f32 %v1768, 0.0
        %v1881 = vmax.f32 %v1770, 0.0
        %v1882 = vmax.f32 %v1435, 0.0
        %v1883 = vmax.f32 %v1437, 0.0
        %v1884 = vmax.f32 %v1548, 0.0
        %v1885 = vmax.f32 %v1550, 0.0
        %v1886 = vmax.f32 %v1661, 0.0
        %v1887 = vmax.f32 %v1663, 0.0
        %v1888 = vmax.f32 %v1774, 0.0
        %v1889 = vmax.f32 %v1776, 0.0
        %v1890 = vmax.f32 %v1439, 0.0
        %v1891 = vmax.f32 %v1441, 0.0
        %v1892 = vmax.f32 %v1552, 0.0
        %v1893 = vmax.f32 %v1554, 0.0
        %v1894 = vmax.f32 %v1665, 0.0
        %v1895 = vmax.f32 %v1667, 0.0
        %v1896 = vmax.f32 %v1778, 0.0
        %v1897 = vmax.f32 %v1780, 0.0
        %v1898 = vmax.f32 %v1445, 0.0
        %v1899 = vmax.f32 %v1447, 0.0
        %v1900 = vmax.f32 %v1558, 0.0
        %v1901 = vmax.f32 %v1560, 0.0
        %v1902 = vmax.f32 %v1671, 0.0
        %v1903 = vmax.f32 %v1673, 0.0
        %v1904 = vmax.f32 %v1784, 0.0
        %v1905 = vmax.f32 %v1786, 0.0
        %v1906 = vmax.f32 %v1449, 0.0
        %v1907 = vmax.f32 %v1451, 0.0
        %v1908 = vmax.f32 %v1562, 0.0
        %v1909 = vmax.f32 %v1564, 0.0
        %v1910 = vmax.f32 %v1675, 0.0
        %v1911 = vmax.f32 %v1677, 0.0
        %v1912 = vmax.f32 %v1788, 0.0
        %v1913 = vmax.f32 %v1790, 0.0
        %v1914 = vmax.f32 %v1455, 0.0
        %v1915 = vmax.f32 %v1457, 0.0
        %v1916 = vmax.f32 %v1568, 0.0
        %v1917 = vmax.f32 %v1570, 0.0
        %v1918 = vmax.f32 %v1681, 0.0
        %v1919 = vmax.f32 %v1683, 0.0
        %v1920 = vmax.f32 %v1794, 0.0
        %v1921 = vmax.f32 %v1796, 0.0
        %v1922 = vmax.f32 %v1459, 0.0
        %v1923 = vmax.f32 %v1461, 0.0
        %v1924 = vmax.f32 %v1572, 0.0
        %v1925 = vmax.f32 %v1574, 0.0
        %v1926 = vmax.f32 %v1685, 0.0
        %v1927 = vmax.f32 %v1687, 0.0
        %v1928 = vmax.f32 %v1798, 0.0
        %v1929 = vmax.f32 %v1800, 0.0
        %v1930 = vadd.f32 %v1802, %v1810
        %v1931 = vadd.f32 %v1930, %v1818
        %v1932 = vadd.f32 %v1931, %v1826
        %v1933 = vadd.f32 %v1932, %v1834
        %v1934 = vadd.f32 %v1933, %v1842
        %v1935 = vadd.f32 %v1934, %v1850
        %v1936 = vadd.f32 %v1935, %v1858
        %v1937 = vadd.f32 %v1936, %v1866
        %v1938 = vadd.f32 %v1937, %v1874
        %v1939 = vadd.f32 %v1938, %v1882
        %v1940 = vadd.f32 %v1939, %v1890
        %v1941 = vadd.f32 %v1940, %v1898
        %v1942 = vadd.f32 %v1941, %v1906
        %v1943 = vadd.f32 %v1942, %v1914
        %v1944 = vadd.f32 %v1943, %v1922
        %v1945 = vrot.slane %v1944, 4
        %v1946 = vadd.f32 %v1944, %v1945
        %v1947 = vrot.slane %v1946, 2
        %v1948 = vadd.f32 %v1946, %v1947
        %v1949 = vrot.slane %v1948, 1
        %v1950 = vadd.f32 %v1948, %v1949
        %v1951 = vadd.f32 %v1803, %v1811
        %v1952 = vadd.f32 %v1951, %v1819
        %v1953 = vadd.f32 %v1952, %v1827
        %v1954 = vadd.f32 %v1953, %v1835
        %v1955 = vadd.f32 %v1954, %v1843
        %v1956 = vadd.f32 %v1955, %v1851
        %v1957 = vadd.f32 %v1956, %v1859
        %v1958 = vadd.f32 %v1957, %v1867
        %v1959 = vadd.f32 %v1958, %v1875
        %v1960 = vadd.f32 %v1959, %v1883
        %v1961 = vadd.f32 %v1960, %v1891
        %v1962 = vadd.f32 %v1961, %v1899
        %v1963 = vadd.f32 %v1962, %v1907
        %v1964 = vadd.f32 %v1963, %v1915
        %v1965 = vadd.f32 %v1964, %v1923
        %v1966 = vrot.slane %v1965, 4
        %v1967 = vadd.f32 %v1965, %v1966
        %v1968 = vrot.slane %v1967, 2
        %v1969 = vadd.f32 %v1967, %v1968
        %v1970 = vrot.slane %v1969, 1
        %v1971 = vadd.f32 %v1969, %v1970
        %v1972 = vadd.f32 %v1804, %v1812
        %v1973 = vadd.f32 %v1972, %v1820
        %v1974 = vadd.f32 %v1973, %v1828
        %v1975 = vadd.f32 %v1974, %v1836
        %v1976 = vadd.f32 %v1975, %v1844
        %v1977 = vadd.f32 %v1976, %v1852
        %v1978 = vadd.f32 %v1977, %v1860
        %v1979 = vadd.f32 %v1978, %v1868
        %v1980 = vadd.f32 %v1979, %v1876
        %v1981 = vadd.f32 %v1980, %v1884
        %v1982 = vadd.f32 %v1981, %v1892
        %v1983 = vadd.f32 %v1982, %v1900
        %v1984 = vadd.f32 %v1983, %v1908
        %v1985 = vadd.f32 %v1984, %v1916
        %v1986 = vadd.f32 %v1985, %v1924
        %v1987 = vrot.slane %v1986, 4
        %v1988 = vadd.f32 %v1986, %v1987
        %v1989 = vrot.slane %v1988, 2
        %v1990 = vadd.f32 %v1988, %v1989
        %v1991 = vrot.slane %v1990, 1
        %v1992 = vadd.f32 %v1990, %v1991
        %v1993 = vadd.f32 %v1805, %v1813
        %v1994 = vadd.f32 %v1993, %v1821
        %v1995 = vadd.f32 %v1994, %v1829
        %v1996 = vadd.f32 %v1995, %v1837
        %v1997 = vadd.f32 %v1996, %v1845
        %v1998 = vadd.f32 %v1997, %v1853
        %v1999 = vadd.f32 %v1998, %v1861
        %v2000 = vadd.f32 %v1999, %v1869
        %v2001 = vadd.f32 %v2000, %v1877
        %v2002 = vadd.f32 %v2001, %v1885
        %v2003 = vadd.f32 %v2002, %v1893
        %v2004 = vadd.f32 %v2003, %v1901
        %v2005 = vadd.f32 %v2004, %v1909
        %v2006 = vadd.f32 %v2005, %v1917
        %v2007 = vadd.f32 %v2006, %v1925
        %v2008 = vrot.slane %v2007, 4
        %v2009 = vadd.f32 %v2007, %v2008
        %v2010 = vrot.slane %v2009, 2
        %v2011 = vadd.f32 %v2009, %v2010
        %v2012 = vrot.slane %v2011, 1
        %v2013 = vadd.f32 %v2011, %v2012
        %v2014 = vadd.f32 %v1806, %v1814
        %v2015 = vadd.f32 %v2014, %v1822
        %v2016 = vadd.f32 %v2015, %v1830
        %v2017 = vadd.f32 %v2016, %v1838
        %v2018 = vadd.f32 %v2017, %v1846
        %v2019 = vadd.f32 %v2018, %v1854
        %v2020 = vadd.f32 %v2019, %v1862
        %v2021 = vadd.f32 %v2020, %v1870
        %v2022 = vadd.f32 %v2021, %v1878
        %v2023 = vadd.f32 %v2022, %v1886
        %v2024 = vadd.f32 %v2023, %v1894
        %v2025 = vadd.f32 %v2024, %v1902
        %v2026 = vadd.f32 %v2025, %v1910
        %v2027 = vadd.f32 %v2026, %v1918
        %v2028 = vadd.f32 %v2027, %v1926
        %v2029 = vrot.slane %v2028, 4
        %v2030 = vadd.f32 %v2028, %v2029
        %v2031 = vrot.slane %v2030, 2
        %v2032 = vadd.f32 %v2030, %v2031
        %v2033 = vrot.slane %v2032, 1
        %v2034 = vadd.f32 %v2032, %v2033
        %v2035 = vadd.f32 %v1807, %v1815
        %v2036 = vadd.f32 %v2035, %v1823
        %v2037 = vadd.f32 %v2036, %v1831
        %v2038 = vadd.f32 %v2037, %v1839
        %v2039 = vadd.f32 %v2038, %v1847
        %v2040 = vadd.f32 %v2039, %v1855
        %v2041 = vadd.f32 %v2040, %v1863
        %v2042 = vadd.f32 %v2041, %v1871
        %v2043 = vadd.f32 %v2042, %v1879
        %v2044 = vadd.f32 %v2043, %v1887
        %v2045 = vadd.f32 %v2044, %v1895
        %v2046 = vadd.f32 %v2045, %v1903
        %v2047 = vadd.f32 %v2046, %v1911
        %v2048 = vadd.f32 %v2047, %v1919
        %v2049 = vadd.f32 %v2048, %v1927
        %v2050 = vrot.slane %v2049, 4
        %v2051 = vadd.f32 %v2049, %v2050
        %v2052 = vrot.slane %v2051, 2
        %v2053 = vadd.f32 %v2051, %v2052
        %v2054 = vrot.slane %v2053, 1
        %v2055 = vadd.f32 %v2053, %v2054
        %v2056 = vadd.f32 %v1808, %v1816
        %v2057 = vadd.f32 %v2056, %v1824
        %v2058 = vadd.f32 %v2057, %v1832
        %v2059 = vadd.f32 %v2058, %v1840
        %v2060 = vadd.f32 %v2059, %v1848
        %v2061 = vadd.f32 %v2060, %v1856
        %v2062 = vadd.f32 %v2061, %v1864
        %v2063 = vadd.f32 %v2062, %v1872
        %v2064 = vadd.f32 %v2063, %v1880
        %v2065 = vadd.f32 %v2064, %v1888
        %v2066 = vadd.f32 %v2065, %v1896
        %v2067 = vadd.f32 %v2066, %v1904
        %v2068 = vadd.f32 %v2067, %v1912
        %v2069 = vadd.f32 %v2068, %v1920
        %v2070 = vadd.f32 %v2069, %v1928
        %v2071 = vrot.slane %v2070, 4
        %v2072 = vadd.f32 %v2070, %v2071
        %v2073 = vrot.slane %v2072, 2
        %v2074 = vadd.f32 %v2072, %v2073
        %v2075 = vrot.slane %v2074, 1
        %v2076 = vadd.f32 %v2074, %v2075
        %v2077 = vadd.f32 %v1809, %v1817
        %v2078 = vadd.f32 %v2077, %v1825
        %v2079 = vadd.f32 %v2078, %v1833
        %v2080 = vadd.f32 %v2079, %v1841
        %v2081 = vadd.f32 %v2080, %v1849
        %v2082 = vadd.f32 %v2081, %v1857
        %v2083 = vadd.f32 %v2082, %v1865
        %v2084 = vadd.f32 %v2083, %v1873
        %v2085 = vadd.f32 %v2084, %v1881
        %v2086 = vadd.f32 %v2085, %v1889
        %v2087 = vadd.f32 %v2086, %v1897
        %v2088 = vadd.f32 %v2087, %v1905
        %v2089 = vadd.f32 %v2088, %v1913
        %v2090 = vadd.f32 %v2089, %v1921
        %v2091 = vadd.f32 %v2090, %v1929
        %v2092 = vrot.slane %v2091, 4
        %v2093 = vadd.f32 %v2091, %v2092
        %v2094 = vrot.slane %v2093, 2
        %v2095 = vadd.f32 %v2093, %v2094
        %v2096 = vrot.slane %v2095, 1
        %v2097 = vadd.f32 %v2095, %v2096
        %v2098 = vadd.f32 %v1261, %v1950
        %v2099 = vadd.f32 %v1262, %v1971
        %v2100 = vadd.f32 %v1263, %v1992
        %v2101 = vadd.f32 %v1264, %v2013
        %v2102 = vadd.f32 %v1265, %v2034
        %v2103 = vadd.f32 %v1266, %v2055
        %v2104 = vadd.f32 %v1267, %v2076
        %v2105 = vadd.f32 %v1268, %v2097
        %v2106 = vld [vmem:[#allocation2] sm:$0xff]
        %v2115 = vcombine.low %v2098, %v2099
        %v2116 = vcombine.low %v2100, %v2101
        %v2117 = vcombine.low %v2102, %v2103
        %v2118 = vcombine.low %v2104, %v2105
        %v2120 = vunpack.c.l.s4 1966171168
        %v2121 = vunpack.c.0.s8 %v2120
        %v2122 = vlaneseq
        %v2123 = vshrl.u32 %v2122, 7
        %v2124 = vsub.s32 %v2121, %v2123
        %v2125 = vrot.slane %v2115, %v2124
        %v2127 = vunpack.c.l.s4 1966171168
        %v2128 = vunpack.c.0.s8 %v2127
        %v2129 = vlaneseq
        %v2130 = vshrl.u32 %v2129, 7
        %v2131 = vsub.s32 %v2128, %v2130
        %v2132 = vrot.slane %v2116, %v2131
        %v2134 = vunpack.c.l.s4 1966171168
        %v2135 = vunpack.c.0.s8 %v2134
        %v2136 = vlaneseq
        %v2137 = vshrl.u32 %v2136, 7
        %v2138 = vsub.s32 %v2135, %v2137
        %v2139 = vrot.slane %v2117, %v2138
        %v2141 = vunpack.c.l.s4 1966171168
        %v2142 = vunpack.c.0.s8 %v2141
        %v2143 = vlaneseq
        %v2144 = vshrl.u32 %v2143, 7
        %v2145 = vsub.s32 %v2142, %v2144
        %v2146 = vrot.slane %v2118, %v2145
        %v2147 = vcombine.low %v2125, %v2132
        %v2148 = vcombine.low %v2139, %v2146
        %v2150 = vunpack.c.l.s4 1966171168
        %v2151 = vunpack.c.0.s8 %v2150
        %v2152 = vlaneseq
        %v2153 = vshrl.u32 %v2152, 7
        %v2154 = vsub.s32 %v2151, %v2153
        %v2155 = vrot.slane %v2147, %v2154
        %v2157 = vunpack.c.l.s4 1966171168
        %v2158 = vunpack.c.0.s8 %v2157
        %v2159 = vlaneseq
        %v2160 = vshrl.u32 %v2159, 7
        %v2161 = vsub.s32 %v2158, %v2160
        %v2162 = vrot.slane %v2148, %v2161
        %v2163 = vcombine.low %v2155, %v2162
        %v2165 = vadd.f32 %v2106, %v2163
        %2166 = vst [vmem:[#allocation2] sm:$0xff] %v2165
        // Predicated region
        $region45: #{image_model_forward.1} parent=39 // pred_check
          %p2167 = pneg %p289
        $region46: #{image_model_forward.1} parent=39 // pred_check_branch
          %2169 = sbr.rel (%p2167) target = $region48
        $region47: #{image_model_forward.1} parent=39 // pred_region
          %v2170 = vld [vmem:[#allocation2] sm:$0xff]
          %v2171 = vmul.f32 %v2170, 0.00390625
          %2172 = vst [vmem:[%s287] sm:$0xff] %v2171
          %v2174 = vlaneseq
          %v2175 = vshrl.u32 %v2174, 7
          %v2176 = vsub.s32 0, %v2175
          %v2177 = vrot.slane %v2171, %v2176
          %v2178 = vlaneseq
          %v2179 = vshrl.u32 %v2178, 7
          %v2180 = vsub.s32 1, %v2179
          %v2181 = vrot.slane %v2171, %v2180
          %v2182 = vlaneseq
          %v2183 = vshrl.u32 %v2182, 7
          %v2184 = vsub.s32 2, %v2183
          %v2185 = vrot.slane %v2171, %v2184
          %v2186 = vlaneseq
          %v2187 = vshrl.u32 %v2186, 7
          %v2188 = vsub.s32 3, %v2187
          %v2189 = vrot.slane %v2171, %v2188
          %v2190 = vlaneseq
          %v2191 = vshrl.u32 %v2190, 7
          %v2192 = vsub.s32 4, %v2191
          %v2193 = vrot.slane %v2171, %v2192
          %v2194 = vlaneseq
          %v2195 = vshrl.u32 %v2194, 7
          %v2196 = vsub.s32 5, %v2195
          %v2197 = vrot.slane %v2171, %v2196
          %v2198 = vlaneseq
          %v2199 = vshrl.u32 %v2198, 7
          %v2200 = vsub.s32 6, %v2199
          %v2201 = vrot.slane %v2171, %v2200
          %v2202 = vlaneseq
          %v2203 = vshrl.u32 %v2202, 7
          %v2204 = vsub.s32 7, %v2203
          %v2205 = vrot.slane %v2171, %v2204
          %v2214 = vpack.c.bf16 %v2177, %v2177
          %v2215 = vpack.c.bf16 %v2181, %v2181
          %v2216 = vpack.c.bf16 %v2185, %v2185
          %v2217 = vpack.c.bf16 %v2189, %v2189
          %v2218 = vpack.c.bf16 %v2193, %v2193
          %v2219 = vpack.c.bf16 %v2197, %v2197
          %v2220 = vpack.c.bf16 %v2201, %v2201
          %v2221 = vpack.c.bf16 %v2205, %v2205
          %v2222 = vld [vmem:[%s3] sm:$0xf]
          %v2223 = vld [vmem:[%s3 + $0x4] sm:$0xf]
          %v2224 = vld [vmem:[%s3 + $0x8] sm:$0xf]
          %v2225 = vld [vmem:[%s3 + $0xc] sm:$0xf]
          %v2226 = vld [vmem:[%s3 + $0x10] sm:$0xf]
          %v2227 = vld [vmem:[%s3 + $0x14] sm:$0xf]
          %v2228 = vld [vmem:[%s3 + $0x18] sm:$0xf]
          %v2229 = vld [vmem:[%s3 + $0x1c] sm:$0xf]
          %v2230 = vld [vmem:[%s3 + $0x20] sm:$0xf]
          %v2231 = vld [vmem:[%s3 + $0x24] sm:$0xf]
          %v2232 = vld [vmem:[%s3 + $0x28] sm:$0xf]
          %v2233 = vld [vmem:[%s3 + $0x2c] sm:$0xf]
          %v2234 = vld [vmem:[%s3 + $0x30] sm:$0xf]
          %v2235 = vld [vmem:[%s3 + $0x34] sm:$0xf]
          %v2236 = vld [vmem:[%s3 + $0x38] sm:$0xf]
          %v2237 = vld [vmem:[%s3 + $0x3c] sm:$0xf]
          %v2238 = vld [vmem:[%s3 + $0x40] sm:$0xf]
          %v2239 = vld [vmem:[%s3 + $0x44] sm:$0xf]
          %v2240 = vld [vmem:[%s3 + $0x48] sm:$0xf]
          %v2241 = vld [vmem:[%s3 + $0x4c] sm:$0xf]
          %v2242 = vld [vmem:[%s3 + $0x50] sm:$0xf]
          %v2243 = vld [vmem:[%s3 + $0x54] sm:$0xf]
          %v2244 = vld [vmem:[%s3 + $0x58] sm:$0xf]
          %v2245 = vld [vmem:[%s3 + $0x5c] sm:$0xf]
          %v2246 = vld [vmem:[%s3 + $0x60] sm:$0xf]
          %v2247 = vld [vmem:[%s3 + $0x64] sm:$0xf]
          %v2248 = vld [vmem:[%s3 + $0x68] sm:$0xf]
          %v2249 = vld [vmem:[%s3 + $0x6c] sm:$0xf]
          %v2250 = vld [vmem:[%s3 + $0x70] sm:$0xf]
          %v2251 = vld [vmem:[%s3 + $0x74] sm:$0xf]
          %v2252 = vld [vmem:[%s3 + $0x78] sm:$0xf]
          %v2253 = vld [vmem:[%s3 + $0x7c] sm:$0xf]
          %v2254 = vld [vmem:[%s3 + $0x80] sm:$0xf]
          %v2255 = vld [vmem:[%s3 + $0x84] sm:$0xf]
          %v2256 = vld [vmem:[%s3 + $0x88] sm:$0xf]
          %v2257 = vld [vmem:[%s3 + $0x8c] sm:$0xf]
          %v2258 = vld [vmem:[%s3 + $0x90] sm:$0xf]
          %v2259 = vld [vmem:[%s3 + $0x94] sm:$0xf]
          %v2260 = vld [vmem:[%s3 + $0x98] sm:$0xf]
          %v2261 = vld [vmem:[%s3 + $0x9c] sm:$0xf]
          %v2262 = vld [vmem:[%s3 + $0xa0] sm:$0xf]
          %v2263 = vld [vmem:[%s3 + $0xa4] sm:$0xf]
          %v2264 = vld [vmem:[%s3 + $0xa8] sm:$0xf]
          %v2265 = vld [vmem:[%s3 + $0xac] sm:$0xf]
          %v2266 = vld [vmem:[%s3 + $0xb0] sm:$0xf]
          %v2267 = vld [vmem:[%s3 + $0xb4] sm:$0xf]
          %v2268 = vld [vmem:[%s3 + $0xb8] sm:$0xf]
          %v2269 = vld [vmem:[%s3 + $0xbc] sm:$0xf]
          %v2270 = vld [vmem:[%s3 + $0xc0] sm:$0xf]
          %v2271 = vld [vmem:[%s3 + $0xc4] sm:$0xf]
          %v2272 = vld [vmem:[%s3 + $0xc8] sm:$0xf]
          %v2273 = vld [vmem:[%s3 + $0xcc] sm:$0xf]
          %v2274 = vld [vmem:[%s3 + $0xd0] sm:$0xf]
          %v2275 = vld [vmem:[%s3 + $0xd4] sm:$0xf]
          %v2276 = vld [vmem:[%s3 + $0xd8] sm:$0xf]
          %v2277 = vld [vmem:[%s3 + $0xdc] sm:$0xf]
          %v2278 = vld [vmem:[%s3 + $0xe0] sm:$0xf]
          %v2279 = vld [vmem:[%s3 + $0xe4] sm:$0xf]
          %v2280 = vld [vmem:[%s3 + $0xe8] sm:$0xf]
          %v2281 = vld [vmem:[%s3 + $0xec] sm:$0xf]
          %v2282 = vld [vmem:[%s3 + $0xf0] sm:$0xf]
          %v2283 = vld [vmem:[%s3 + $0xf4] sm:$0xf]
          %v2284 = vld [vmem:[%s3 + $0xf8] sm:$0xf]
          %v2285 = vld [vmem:[%s3 + $0xfc] sm:$0xf]
          %v2286 = vld [vmem:[%s3 + $0x100] sm:$0xf]
          %v2287 = vld [vmem:[%s3 + $0x104] sm:$0xf]
          %v2288 = vld [vmem:[%s3 + $0x108] sm:$0xf]
          %v2289 = vld [vmem:[%s3 + $0x10c] sm:$0xf]
          %v2290 = vld [vmem:[%s3 + $0x110] sm:$0xf]
          %v2291 = vld [vmem:[%s3 + $0x114] sm:$0xf]
          %v2292 = vld [vmem:[%s3 + $0x118] sm:$0xf]
          %v2293 = vld [vmem:[%s3 + $0x11c] sm:$0xf]
          %v2294 = vld [vmem:[%s3 + $0x120] sm:$0xf]
          %v2295 = vld [vmem:[%s3 + $0x124] sm:$0xf]
          %v2296 = vld [vmem:[%s3 + $0x128] sm:$0xf]
          %v2297 = vld [vmem:[%s3 + $0x12c] sm:$0xf]
          %v2298 = vld [vmem:[%s3 + $0x130] sm:$0xf]
          %v2299 = vld [vmem:[%s3 + $0x134] sm:$0xf]
          %v2300 = vld [vmem:[%s3 + $0x138] sm:$0xf]
          %v2301 = vld [vmem:[%s3 + $0x13c] sm:$0xf]
          %v2302 = vld [vmem:[%s3 + $0x140] sm:$0xf]
          %v2303 = vld [vmem:[%s3 + $0x144] sm:$0xf]
          %v2304 = vld [vmem:[%s3 + $0x148] sm:$0xf]
          %v2305 = vld [vmem:[%s3 + $0x14c] sm:$0xf]
          %v2306 = vld [vmem:[%s3 + $0x150] sm:$0xf]
          %v2307 = vld [vmem:[%s3 + $0x154] sm:$0xf]
          %v2308 = vld [vmem:[%s3 + $0x158] sm:$0xf]
          %v2309 = vld [vmem:[%s3 + $0x15c] sm:$0xf]
          %v2310 = vld [vmem:[%s3 + $0x160] sm:$0xf]
          %v2311 = vld [vmem:[%s3 + $0x164] sm:$0xf]
          %v2312 = vld [vmem:[%s3 + $0x168] sm:$0xf]
          %v2313 = vld [vmem:[%s3 + $0x16c] sm:$0xf]
          %v2314 = vld [vmem:[%s3 + $0x170] sm:$0xf]
          %v2315 = vld [vmem:[%s3 + $0x174] sm:$0xf]
          %v2316 = vld [vmem:[%s3 + $0x178] sm:$0xf]
          %v2317 = vld [vmem:[%s3 + $0x17c] sm:$0xf]
          %v2318 = vld [vmem:[%s3 + $0x180] sm:$0xf]
          %v2319 = vld [vmem:[%s3 + $0x184] sm:$0xf]
          %v2320 = vld [vmem:[%s3 + $0x188] sm:$0xf]
          %v2321 = vld [vmem:[%s3 + $0x18c] sm:$0xf]
          %v2322 = vld [vmem:[%s3 + $0x190] sm:$0xf]
          %v2323 = vld [vmem:[%s3 + $0x194] sm:$0xf]
          %v2324 = vld [vmem:[%s3 + $0x198] sm:$0xf]
          %v2325 = vld [vmem:[%s3 + $0x19c] sm:$0xf]
          %v2326 = vld [vmem:[%s3 + $0x1a0] sm:$0xf]
          %v2327 = vld [vmem:[%s3 + $0x1a4] sm:$0xf]
          %v2328 = vld [vmem:[%s3 + $0x1a8] sm:$0xf]
          %v2329 = vld [vmem:[%s3 + $0x1ac] sm:$0xf]
          %v2330 = vld [vmem:[%s3 + $0x1b0] sm:$0xf]
          %v2331 = vld [vmem:[%s3 + $0x1b4] sm:$0xf]
          %v2332 = vld [vmem:[%s3 + $0x1b8] sm:$0xf]
          %v2333 = vld [vmem:[%s3 + $0x1bc] sm:$0xf]
          %v2334 = vld [vmem:[%s3 + $0x1c0] sm:$0xf]
          %v2335 = vld [vmem:[%s3 + $0x1c4] sm:$0xf]
          %v2336 = vld [vmem:[%s3 + $0x1c8] sm:$0xf]
          %v2337 = vld [vmem:[%s3 + $0x1cc] sm:$0xf]
          %v2338 = vld [vmem:[%s3 + $0x1d0] sm:$0xf]
          %v2339 = vld [vmem:[%s3 + $0x1d4] sm:$0xf]
          %v2340 = vld [vmem:[%s3 + $0x1d8] sm:$0xf]
          %v2341 = vld [vmem:[%s3 + $0x1dc] sm:$0xf]
          %v2342 = vld [vmem:[%s3 + $0x1e0] sm:$0xf]
          %v2343 = vld [vmem:[%s3 + $0x1e4] sm:$0xf]
          %v2344 = vld [vmem:[%s3 + $0x1e8] sm:$0xf]
          %v2345 = vld [vmem:[%s3 + $0x1ec] sm:$0xf]
          %v2346 = vld [vmem:[%s3 + $0x1f0] sm:$0xf]
          %v2347 = vld [vmem:[%s3 + $0x1f4] sm:$0xf]
          %v2348 = vld [vmem:[%s3 + $0x1f8] sm:$0xf]
          %v2349 = vld [vmem:[%s3 + $0x1fc] sm:$0xf]
          %v2350 = vld [vmem:[%s4] sm:$0x1]
          %v2479 = vunpack.c.l.b16 %v2222
          %v2480 = vunpack.c.l.b16 %v2223
          %v2481 = vunpack.c.l.b16 %v2224
          %v2482 = vunpack.c.l.b16 %v2225
          %v2483 = vunpack.c.l.b16 %v2226
          %v2484 = vunpack.c.l.b16 %v2227
          %v2485 = vunpack.c.l.b16 %v2228
          %v2486 = vunpack.c.l.b16 %v2229
          %v2487 = vunpack.c.l.b16 %v2230
          %v2488 = vunpack.c.l.b16 %v2231
          %v2489 = vunpack.c.l.b16 %v2232
          %v2490 = vunpack.c.l.b16 %v2233
          %v2491 = vunpack.c.l.b16 %v2234
          %v2492 = vunpack.c.l.b16 %v2235
          %v2493 = vunpack.c.l.b16 %v2236
          %v2494 = vunpack.c.l.b16 %v2237
          %v2495 = vunpack.c.l.b16 %v2238
          %v2496 = vunpack.c.l.b16 %v2239
          %v2497 = vunpack.c.l.b16 %v2240
          %v2498 = vunpack.c.l.b16 %v2241
          %v2499 = vunpack.c.l.b16 %v2242
          %v2500 = vunpack.c.l.b16 %v2243
          %v2501 = vunpack.c.l.b16 %v2244
          %v2502 = vunpack.c.l.b16 %v2245
          %v2503 = vunpack.c.l.b16 %v2246
          %v2504 = vunpack.c.l.b16 %v2247
          %v2505 = vunpack.c.l.b16 %v2248
          %v2506 = vunpack.c.l.b16 %v2249
          %v2507 = vunpack.c.l.b16 %v2250
          %v2508 = vunpack.c.l.b16 %v2251
          %v2509 = vunpack.c.l.b16 %v2252
          %v2510 = vunpack.c.l.b16 %v2253
          %v2511 = vunpack.c.l.b16 %v2254
          %v2512 = vunpack.c.l.b16 %v2255
          %v2513 = vunpack.c.l.b16 %v2256
          %v2514 = vunpack.c.l.b16 %v2257
          %v2515 = vunpack.c.l.b16 %v2258
          %v2516 = vunpack.c.l.b16 %v2259
          %v2517 = vunpack.c.l.b16 %v2260
          %v2518 = vunpack.c.l.b16 %v2261
          %v2519 = vunpack.c.l.b16 %v2262
          %v2520 = vunpack.c.l.b16 %v2263
          %v2521 = vunpack.c.l.b16 %v2264
          %v2522 = vunpack.c.l.b16 %v2265
          %v2523 = vunpack.c.l.b16 %v2266
          %v2524 = vunpack.c.l.b16 %v2267
          %v2525 = vunpack.c.l.b16 %v2268
          %v2526 = vunpack.c.l.b16 %v2269
          %v2527 = vunpack.c.l.b16 %v2270
          %v2528 = vunpack.c.l.b16 %v2271
          %v2529 = vunpack.c.l.b16 %v2272
          %v2530 = vunpack.c.l.b16 %v2273
          %v2531 = vunpack.c.l.b16 %v2274
          %v2532 = vunpack.c.l.b16 %v2275
          %v2533 = vunpack.c.l.b16 %v2276
          %v2534 = vunpack.c.l.b16 %v2277
          %v2535 = vunpack.c.l.b16 %v2278
          %v2536 = vunpack.c.l.b16 %v2279
          %v2537 = vunpack.c.l.b16 %v2280
          %v2538 = vunpack.c.l.b16 %v2281
          %v2539 = vunpack.c.l.b16 %v2282
          %v2540 = vunpack.c.l.b16 %v2283
          %v2541 = vunpack.c.l.b16 %v2284
          %v2542 = vunpack.c.l.b16 %v2285
          %v2543 = vunpack.c.l.b16 %v2286
          %v2544 = vunpack.c.l.b16 %v2287
          %v2545 = vunpack.c.l.b16 %v2288
          %v2546 = vunpack.c.l.b16 %v2289
          %v2547 = vunpack.c.l.b16 %v2290
          %v2548 = vunpack.c.l.b16 %v2291
          %v2549 = vunpack.c.l.b16 %v2292
          %v2550 = vunpack.c.l.b16 %v2293
          %v2551 = vunpack.c.l.b16 %v2294
          %v2552 = vunpack.c.l.b16 %v2295
          %v2553 = vunpack.c.l.b16 %v2296
          %v2554 = vunpack.c.l.b16 %v2297
          %v2555 = vunpack.c.l.b16 %v2298
          %v2556 = vunpack.c.l.b16 %v2299
          %v2557 = vunpack.c.l.b16 %v2300
          %v2558 = vunpack.c.l.b16 %v2301
          %v2559 = vunpack.c.l.b16 %v2302
          %v2560 = vunpack.c.l.b16 %v2303
          %v2561 = vunpack.c.l.b16 %v2304
          %v2562 = vunpack.c.l.b16 %v2305
          %v2563 = vunpack.c.l.b16 %v2306
          %v2564 = vunpack.c.l.b16 %v2307
          %v2565 = vunpack.c.l.b16 %v2308
          %v2566 = vunpack.c.l.b16 %v2309
          %v2567 = vunpack.c.l.b16 %v2310
          %v2568 = vunpack.c.l.b16 %v2311
          %v2569 = vunpack.c.l.b16 %v2312
          %v2570 = vunpack.c.l.b16 %v2313
          %v2571 = vunpack.c.l.b16 %v2314
          %v2572 = vunpack.c.l.b16 %v2315
          %v2573 = vunpack.c.l.b16 %v2316
          %v2574 = vunpack.c.l.b16 %v2317
          %v2575 = vunpack.c.l.b16 %v2318
          %v2576 = vunpack.c.l.b16 %v2319
          %v2577 = vunpack.c.l.b16 %v2320
          %v2578 = vunpack.c.l.b16 %v2321
          %v2579 = vunpack.c.l.b16 %v2322
          %v2580 = vunpack.c.l.b16 %v2323
          %v2581 = vunpack.c.l.b16 %v2324
          %v2582 = vunpack.c.l.b16 %v2325
          %v2583 = vunpack.c.l.b16 %v2326
          %v2584 = vunpack.c.l.b16 %v2327
          %v2585 = vunpack.c.l.b16 %v2328
          %v2586 = vunpack.c.l.b16 %v2329
          %v2587 = vunpack.c.l.b16 %v2330
          %v2588 = vunpack.c.l.b16 %v2331
          %v2589 = vunpack.c.l.b16 %v2332
          %v2590 = vunpack.c.l.b16 %v2333
          %v2591 = vunpack.c.l.b16 %v2334
          %v2592 = vunpack.c.l.b16 %v2335
          %v2593 = vunpack.c.l.b16 %v2336
          %v2594 = vunpack.c.l.b16 %v2337
          %v2595 = vunpack.c.l.b16 %v2338
          %v2596 = vunpack.c.l.b16 %v2339
          %v2597 = vunpack.c.l.b16 %v2340
          %v2598 = vunpack.c.l.b16 %v2341
          %v2599 = vunpack.c.l.b16 %v2342
          %v2600 = vunpack.c.l.b16 %v2343
          %v2601 = vunpack.c.l.b16 %v2344
          %v2602 = vunpack.c.l.b16 %v2345
          %v2603 = vunpack.c.l.b16 %v2346
          %v2604 = vunpack.c.l.b16 %v2347
          %v2605 = vunpack.c.l.b16 %v2348
          %v2606 = vunpack.c.l.b16 %v2349
          %v2607 = vpack.c.b16 %v2480, %v2479
          %v2608 = vpack.c.b16 %v2482, %v2481
          %v2609 = vpack.c.b16 %v2484, %v2483
          %v2610 = vpack.c.b16 %v2486, %v2485
          %v2611 = vpack.c.b16 %v2488, %v2487
          %v2612 = vpack.c.b16 %v2490, %v2489
          %v2613 = vpack.c.b16 %v2492, %v2491
          %v2614 = vpack.c.b16 %v2494, %v2493
          %v2615 = vpack.c.b16 %v2496, %v2495
          %v2616 = vpack.c.b16 %v2498, %v2497
          %v2617 = vpack.c.b16 %v2500, %v2499
          %v2618 = vpack.c.b16 %v2502, %v2501
          %v2619 = vpack.c.b16 %v2504, %v2503
          %v2620 = vpack.c.b16 %v2506, %v2505
          %v2621 = vpack.c.b16 %v2508, %v2507
          %v2622 = vpack.c.b16 %v2510, %v2509
          %v2623 = vpack.c.b16 %v2512, %v2511
          %v2624 = vpack.c.b16 %v2514, %v2513
          %v2625 = vpack.c.b16 %v2516, %v2515
          %v2626 = vpack.c.b16 %v2518, %v2517
          %v2627 = vpack.c.b16 %v2520, %v2519
          %v2628 = vpack.c.b16 %v2522, %v2521
          %v2629 = vpack.c.b16 %v2524, %v2523
          %v2630 = vpack.c.b16 %v2526, %v2525
          %v2631 = vpack.c.b16 %v2528, %v2527
          %v2632 = vpack.c.b16 %v2530, %v2529
          %v2633 = vpack.c.b16 %v2532, %v2531
          %v2634 = vpack.c.b16 %v2534, %v2533
          %v2635 = vpack.c.b16 %v2536, %v2535
          %v2636 = vpack.c.b16 %v2538, %v2537
          %v2637 = vpack.c.b16 %v2540, %v2539
          %v2638 = vpack.c.b16 %v2542, %v2541
          %v2639 = vpack.c.b16 %v2544, %v2543
          %v2640 = vpack.c.b16 %v2546, %v2545
          %v2641 = vpack.c.b16 %v2548, %v2547
          %v2642 = vpack.c.b16 %v2550, %v2549
          %v2643 = vpack.c.b16 %v2552, %v2551
          %v2644 = vpack.c.b16 %v2554, %v2553
          %v2645 = vpack.c.b16 %v2556, %v2555
          %v2646 = vpack.c.b16 %v2558, %v2557
          %v2647 = vpack.c.b16 %v2560, %v2559
          %v2648 = vpack.c.b16 %v2562, %v2561
          %v2649 = vpack.c.b16 %v2564, %v2563
          %v2650 = vpack.c.b16 %v2566, %v2565
          %v2651 = vpack.c.b16 %v2568, %v2567
          %v2652 = vpack.c.b16 %v2570, %v2569
          %v2653 = vpack.c.b16 %v2572, %v2571
          %v2654 = vpack.c.b16 %v2574, %v2573
          %v2655 = vpack.c.b16 %v2576, %v2575
          %v2656 = vpack.c.b16 %v2578, %v2577
          %v2657 = vpack.c.b16 %v2580, %v2579
          %v2658 = vpack.c.b16 %v2582, %v2581
          %v2659 = vpack.c.b16 %v2584, %v2583
          %v2660 = vpack.c.b16 %v2586, %v2585
          %v2661 = vpack.c.b16 %v2588, %v2587
          %v2662 = vpack.c.b16 %v2590, %v2589
          %v2663 = vpack.c.b16 %v2592, %v2591
          %v2664 = vpack.c.b16 %v2594, %v2593
          %v2665 = vpack.c.b16 %v2596, %v2595
          %v2666 = vpack.c.b16 %v2598, %v2597
          %v2667 = vpack.c.b16 %v2600, %v2599
          %v2668 = vpack.c.b16 %v2602, %v2601
          %v2669 = vpack.c.b16 %v2604, %v2603
          %v2670 = vpack.c.b16 %v2606, %v2605
          %2735 = vmatprep.subr.bf16.mxu0 0
          %2736 = vmatpush1.bf16.msra.mxu0 %v2614
          %2737 = vmatprep.subr.bf16.mxu0 0
          %2738 = vmatpush1.bf16.msra.mxu0 %v2613
          %2739 = vmatprep.subr.bf16.mxu0 0
          %2740 = vmatpush1.bf16.msra.mxu0 %v2612
          %2741 = vmatprep.subr.bf16.mxu0 0
          %2742 = vmatpush1.bf16.msra.mxu0 %v2611
          %2743 = vmatprep.subr.bf16.mxu0 0
          %2744 = vmatpush1.bf16.msra.mxu0 %v2610
          %2745 = vmatprep.subr.bf16.mxu0 0
          %2746 = vmatpush1.bf16.msra.mxu0 %v2609
          %2747 = vmatprep.subr.bf16.mxu0 0
          %2748 = vmatpush1.bf16.msra.mxu0 %v2608
          %2749 = vmatprep.subr.bf16.mxu0 0
          %2750 = vmatpush1.bf16.msra.mxu0 %v2607
          %2751 = vmatprep.subr.bf16.mxu0 0
          %2752 = vmatpush2.bf16.msra.mxu0 %v2622
          %2753 = vmatprep.subr.bf16.mxu0 0
          %2754 = vmatpush2.bf16.msra.mxu0 %v2621
          %2755 = vmatprep.subr.bf16.mxu0 0
          %2756 = vmatpush2.bf16.msra.mxu0 %v2620
          %2757 = vmatprep.subr.bf16.mxu0 0
          %2758 = vmatpush2.bf16.msra.mxu0 %v2619
          %2759 = vmatprep.subr.bf16.mxu0 0
          %2760 = vmatpush2.bf16.msra.mxu0 %v2618
          %2761 = vmatprep.subr.bf16.mxu0 0
          %2762 = vmatpush2.bf16.msra.mxu0 %v2617
          %2763 = vmatprep.subr.bf16.mxu0 0
          %2764 = vmatpush2.bf16.msra.mxu0 %v2616
          %2765 = vmatprep.subr.bf16.mxu0 0
          %2766 = vmatpush2.bf16.msra.mxu0 %v2615
          %2767 = vmatprep.mubr.bf16.mxu0 %v2215
          %2768 = vmatmul.mubr.bf16.gmra.mxu0 %v2214
          %v2769 = vpop.f32.mrf.mxu0
          %v2770 = vadd.f32 %v2350, %v2769
          %v2771 = vpop.f32.mrf.mxu0
          %v2772 = vpop.f32.mrf.mxu0
          %v2773 = vpop.f32.mrf.mxu0
          %2774 = vdwg.mxu0
          %2775 = vmatprep.subr.bf16.mxu0 0
          %2776 = vmatpush1.bf16.msra.mxu0 %v2630
          %2777 = vmatprep.subr.bf16.mxu0 0
          %2778 = vmatpush1.bf16.msra.mxu0 %v2629
          %2779 = vmatprep.subr.bf16.mxu0 0
          %2780 = vmatpush1.bf16.msra.mxu0 %v2628
          %2781 = vmatprep.subr.bf16.mxu0 0
          %2782 = vmatpush1.bf16.msra.mxu0 %v2627
          %2783 = vmatprep.subr.bf16.mxu0 0
          %2784 = vmatpush1.bf16.msra.mxu0 %v2626
          %2785 = vmatprep.subr.bf16.mxu0 0
          %2786 = vmatpush1.bf16.msra.mxu0 %v2625
          %2787 = vmatprep.subr.bf16.mxu0 0
          %2788 = vmatpush1.bf16.msra.mxu0 %v2624
          %2789 = vmatprep.subr.bf16.mxu0 0
          %2790 = vmatpush1.bf16.msra.mxu0 %v2623
          %2791 = vmatprep.subr.bf16.mxu0 0
          %2792 = vmatpush2.bf16.msra.mxu0 %v2638
          %2793 = vmatprep.subr.bf16.mxu0 0
          %2794 = vmatpush2.bf16.msra.mxu0 %v2637
          %2795 = vmatprep.subr.bf16.mxu0 0
          %2796 = vmatpush2.bf16.msra.mxu0 %v2636
          %2797 = vmatprep.subr.bf16.mxu0 0
          %2798 = vmatpush2.bf16.msra.mxu0 %v2635
          %2799 = vmatprep.subr.bf16.mxu0 0
          %2800 = vmatpush2.bf16.msra.mxu0 %v2634
          %2801 = vmatprep.subr.bf16.mxu0 0
          %2802 = vmatpush2.bf16.msra.mxu0 %v2633
          %2803 = vmatprep.subr.bf16.mxu0 0
          %2804 = vmatpush2.bf16.msra.mxu0 %v2632
          %2805 = vmatprep.subr.bf16.mxu0 0
          %2806 = vmatpush2.bf16.msra.mxu0 %v2631
          %2807 = vmatprep.mubr.bf16.mxu0 %v2217
          %2808 = vmatmul.mubr.bf16.gmra.mxu0 %v2216
          %v2809 = vpop.f32.mrf.mxu0
          %v2810 = vadd.f32 %v2770, %v2809
          %v2811 = vpop.f32.mrf.mxu0
          %v2812 = vpop.f32.mrf.mxu0
          %v2813 = vpop.f32.mrf.mxu0
          %2814 = vdwg.mxu0
          %2815 = vmatprep.subr.bf16.mxu0 0
          %2816 = vmatpush1.bf16.msra.mxu0 %v2646
          %2817 = vmatprep.subr.bf16.mxu0 0
          %2818 = vmatpush1.bf16.msra.mxu0 %v2645
          %2819 = vmatprep.subr.bf16.mxu0 0
          %2820 = vmatpush1.bf16.msra.mxu0 %v2644
          %2821 = vmatprep.subr.bf16.mxu0 0
          %2822 = vmatpush1.bf16.msra.mxu0 %v2643
          %2823 = vmatprep.subr.bf16.mxu0 0
          %2824 = vmatpush1.bf16.msra.mxu0 %v2642
          %2825 = vmatprep.subr.bf16.mxu0 0
          %2826 = vmatpush1.bf16.msra.mxu0 %v2641
          %2827 = vmatprep.subr.bf16.mxu0 0
          %2828 = vmatpush1.bf16.msra.mxu0 %v2640
          %2829 = vmatprep.subr.bf16.mxu0 0
          %2830 = vmatpush1.bf16.msra.mxu0 %v2639
          %2831 = vmatprep.subr.bf16.mxu0 0
          %2832 = vmatpush2.bf16.msra.mxu0 %v2654
          %2833 = vmatprep.subr.bf16.mxu0 0
          %2834 = vmatpush2.bf16.msra.mxu0 %v2653
          %2835 = vmatprep.subr.bf16.mxu0 0
          %2836 = vmatpush2.bf16.msra.mxu0 %v2652
          %2837 = vmatprep.subr.bf16.mxu0 0
          %2838 = vmatpush2.bf16.msra.mxu0 %v2651
          %2839 = vmatprep.subr.bf16.mxu0 0
          %2840 = vmatpush2.bf16.msra.mxu0 %v2650
          %2841 = vmatprep.subr.bf16.mxu0 0
          %2842 = vmatpush2.bf16.msra.mxu0 %v2649
          %2843 = vmatprep.subr.bf16.mxu0 0
          %2844 = vmatpush2.bf16.msra.mxu0 %v2648
          %2845 = vmatprep.subr.bf16.mxu0 0
          %2846 = vmatpush2.bf16.msra.mxu0 %v2647
          %2847 = vmatprep.mubr.bf16.mxu0 %v2219
          %2848 = vmatmul.mubr.bf16.gmra.mxu0 %v2218
          %v2849 = vpop.f32.mrf.mxu0
          %v2850 = vadd.f32 %v2810, %v2849
          %v2851 = vpop.f32.mrf.mxu0
          %v2852 = vpop.f32.mrf.mxu0
          %v2853 = vpop.f32.mrf.mxu0
          %2854 = vdwg.mxu0
          %2855 = vmatprep.subr.bf16.mxu0 0
          %2856 = vmatpush1.bf16.msra.mxu0 %v2662
          %2857 = vmatprep.subr.bf16.mxu0 0
          %2858 = vmatpush1.bf16.msra.mxu0 %v2661
          %2859 = vmatprep.subr.bf16.mxu0 0
          %2860 = vmatpush1.bf16.msra.mxu0 %v2660
          %2861 = vmatprep.subr.bf16.mxu0 0
          %2862 = vmatpush1.bf16.msra.mxu0 %v2659
          %2863 = vmatprep.subr.bf16.mxu0 0
          %2864 = vmatpush1.bf16.msra.mxu0 %v2658
          %2865 = vmatprep.subr.bf16.mxu0 0
          %2866 = vmatpush1.bf16.msra.mxu0 %v2657
          %2867 = vmatprep.subr.bf16.mxu0 0
          %2868 = vmatpush1.bf16.msra.mxu0 %v2656
          %2869 = vmatprep.subr.bf16.mxu0 0
          %2870 = vmatpush1.bf16.msra.mxu0 %v2655
          %2871 = vmatprep.subr.bf16.mxu0 0
          %2872 = vmatpush2.bf16.msra.mxu0 %v2670
          %2873 = vmatprep.subr.bf16.mxu0 0
          %2874 = vmatpush2.bf16.msra.mxu0 %v2669
          %2875 = vmatprep.subr.bf16.mxu0 0
          %2876 = vmatpush2.bf16.msra.mxu0 %v2668
          %2877 = vmatprep.subr.bf16.mxu0 0
          %2878 = vmatpush2.bf16.msra.mxu0 %v2667
          %2879 = vmatprep.subr.bf16.mxu0 0
          %2880 = vmatpush2.bf16.msra.mxu0 %v2666
          %2881 = vmatprep.subr.bf16.mxu0 0
          %2882 = vmatpush2.bf16.msra.mxu0 %v2665
          %2883 = vmatprep.subr.bf16.mxu0 0
          %2884 = vmatpush2.bf16.msra.mxu0 %v2664
          %2885 = vmatprep.subr.bf16.mxu0 0
          %2886 = vmatpush2.bf16.msra.mxu0 %v2663
          %2887 = vmatprep.mubr.bf16.mxu0 %v2221
          %2888 = vmatmul.mubr.bf16.gmra.mxu0 %v2220
          %v2889 = vpop.f32.mrf.mxu0
          %v2890 = vadd.f32 %v2850, %v2889
          %v2891 = vpop.f32.mrf.mxu0
          %v2892 = vpop.f32.mrf.mxu0
          %v2893 = vpop.f32.mrf.mxu0
          %2894 = vdwg.mxu0
          %v2895 = vmul.f32 %v2890, %v2890
          %vm2896 = vcmask 1040384
          %v2897 = vsel %vm2896, %v2895, 0.0
          %2898 = vadd.xlane.f32.xlu0 %v2897
          %v2899 = vpop.xlane.xlu0 %2898
          %v2900 = vmax.f32 %v2899, 1e-24
          %v2901 = vrsqrt.pop %v2900
          %v2902 = vmul.f32 %v2890, %v2901
          %2903 = vst [vmem:[%s273] sm:$0x1] %v2902
        $region48: #{image_model_forward.1} parent=39 // pred_fallthru
          _
        %p2904 = scmp.lt.s32.totalorder %s25, 1
        %s2905 = scalar_select %p2904, %s25, 1
        %s2906 = smul.addr %s2905, 8
        %s2907 = scalar_lea.vmem %s5, %s2906
        %s2908 = sand.u32 %s179, 1
        %s2909 = scalar_lea.sflag [#allocation4], %s2908
        %s2910 = sand.u32 %s179, 1
        %s2911 = scalar_lea.vmem [#allocation3], %s2910
        // Predicated region
        $region49: #{image_model_forward.1} parent=39 // pred_check
          %p2912 = pneg %p163
        $region50: #{image_model_forward.1} parent=39 // pred_check_branch
          %2914 = sbr.rel (%p2912) target = $region52
        $region51: #{image_model_forward.1} parent=39 // pred_region
          _
        $region52: #{image_model_forward.1} parent=39 // pred_fallthru
          _
        // Predicated region
        $region53: #{image_model_forward.1} parent=39 // pred_check
          %p2915 = pneg %p189
        $region54: #{image_model_forward.1} parent=39 // pred_check_branch
          %2917 = sbr.rel (%p2915) target = $region56
        $region55: #{image_model_forward.1} parent=39 // pred_region
          %s2919 = ssub.s32 16, 16
          %2920 = vsyncadd %s2909, %s2919
          %s2921 = smul.addr %s25, 16
          %s2922 = scalar_lea.hbm %s6, %s2921
          %s2924 = sshll.u32 %s2911, 4
          %s2925 = int_to_ptr.vmem [resolvable:$true] %s2924
          %2927 = dma.vmem_to_hbm [thread:$0]  %s2925, 16, %s2922, %s2909
        $region56: #{image_model_forward.1} parent=39 // pred_fallthru
          _
      $region40: #{image_model_forward.1} parent=5 // pred_fallthru
        _
      %p2928 = scmp.le.s32.totalorder 2, %s16
      // Predicated region
      $region57: #{image_model_forward.1} parent=5 // pred_check
        %p2929 = pneg %p2928
      $region58: #{image_model_forward.1} parent=5 // pred_check_branch
        %2931 = sbr.rel (%p2929) target = $region60
      $region59: #{image_model_forward.1} parent=5 // pred_region
        %s2932 = ssub.s32 %s16, 2
        // Predicated region
        $region61: #{image_model_forward.1} parent=59 // pred_check
          %p2933 = pneg %p169
        $region62: #{image_model_forward.1} parent=59 // pred_check_branch
          %2935 = sbr.rel (%p2933) target = $region64
        $region63: #{image_model_forward.1} parent=59 // pred_region
          %p2936 = scmp.lt.s32.totalorder %s27, 1
          %s2937 = scalar_select %p2936, %s27, 1
          %s2938 = smul.addr %s2937, 8
          %s2939 = scalar_lea.vmem %s5, %s2938
        $region64: #{image_model_forward.1} parent=59 // pred_fallthru
          _
        // Predicated region
        $region65: #{image_model_forward.1} parent=59 // pred_check
          %p2940 = pneg %p195
        $region66: #{image_model_forward.1} parent=59 // pred_check_branch
          %2942 = sbr.rel (%p2940) target = $region68
        $region67: #{image_model_forward.1} parent=59 // pred_region
          %s2943 = sand.u32 %s180, 1
          %s2944 = scalar_lea.sflag [#allocation4], %s2943
          %s2945 = sand.u32 %s180, 1
          %s2946 = scalar_lea.vmem [#allocation3], %s2945
          %2947 = dma.done %s2944, 16
        $region68: #{image_model_forward.1} parent=59 // pred_fallthru
          _
      $region60: #{image_model_forward.1} parent=5 // pred_fallthru
        _
    $region6: #{image_model_forward.1} parent=1 // loop_footer
      %s20 = sadd.s32 1, %s16
    $region7: #{image_model_forward.1} parent=1 // loop_footer_branch
      %15 = sbr.rel target = $region3
    $region8: #{image_model_forward.1} parent=1 // loop_exit
      _
    %2948 = vsyncpa [#allocation4], 1
    %s2949 = scalar_lea.sflag [#allocation4], 1
    %2950 = vsyncpa %s2949, 1

</llo_original>
